<compile_context>
chip_gen: v7x
topology: tpu7x:2x2x1
jax: 0.10.0
libtpu: 0.0.40
codegen_flags: <defaults>
</compile_context>

<pallas_src>
import functools

import jax
import jax.numpy as jnp
from jax.experimental import pallas as pl
from jax.experimental.pallas import tpu as pltpu


def siglip_attn_kernel(x_ref, wqkv_ref, bqkv_ref, wo3_ref, bo_ref,
                       out_ref, *rest, head_block, head_dim, have_attw):
    # x block:    (1, S, D)        bf16
    # wqkv block: (D, 3*hb*hd)     bf16   (scale folded into Q columns)
    # bqkv block: (1, 3*hb*hd)     f32    (scale folded into Q bias)
    # wo3 block:  (hb, hd, D)      bf16
    # bo block:   (1, D)           f32
    # out block:  (1, S, D)        x.dtype (resident across the group axis)
    # rest:       [attw block (1, hb, S, S)]? , acc scratch (S, D) f32
    if have_attw:
        attw_ref, acc_ref = rest
    else:
        (acc_ref,) = rest

    g = pl.program_id(1)
    hb, hd = head_block, head_dim
    cols = hb * hd
    x = x_ref[0]                                     # (S, D) bf16
    S = x.shape[0]

    # Fused scaled-QKV projection: bf16 operands, f32 accumulation, then bias
    # add and a SINGLE cast to bf16 for all downstream consumers.
    qkv = jnp.dot(x, wqkv_ref[...], preferred_element_type=jnp.float32)
    qkv_bf = (qkv + bqkv_ref[...]).astype(jnp.bfloat16)          # (S, 3*cols)

    def split(p):                                    # -> (hb, S, hd) bf16
        return jnp.swapaxes(
            qkv_bf[:, p * cols:(p + 1) * cols].reshape(S, hb, hd), 0, 1)

    q3, k3, v3 = split(0), split(1), split(2)

    # scores[h, q, k]: contract head_dim directly (no K transpose), batched
    # over the group's heads so the MXU sees hb*S rows per pass.
    scores = jnp.einsum("hqd,hkd->hqk", q3, k3,
                        preferred_element_type=jnp.float32)      # (hb, S, S)

    # Softmax in f32 (v5e-safe); divide -> EUP reciprocal (approx).
    m = jnp.max(scores, axis=-1, keepdims=True)
    e = jnp.exp(scores - m)
    denom = jnp.sum(e, axis=-1, keepdims=True)
    w = e * pl.reciprocal(denom, approx=True)                    # (hb, S, S)

    # Single f32 -> bf16 pack of the largest tensor; reused below.
    w_bf = w.astype(jnp.bfloat16)
    if have_attw:
        if attw_ref.dtype == jnp.bfloat16:
            attw_ref[0] = w_bf
        else:
            attw_ref[0] = w.astype(attw_ref.dtype)

    # attention_dropout == 0.0 -> identity (no dropout applied).
    o3 = jnp.einsum("hqk,hkd->hqd", w_bf, v3,
                    preferred_element_type=jnp.float32)          # (hb, S, hd)

    # Output projection: batched per head (contract hd), then sum over the
    # group's heads.  No (hb, S, hd) -> (S, hb*hd) relayout is materialized.
    per_head = jnp.einsum("hqd,hde->hqe", o3.astype(jnp.bfloat16), wo3_ref[...],
                          preferred_element_type=jnp.float32)    # (hb, S, D)
    contrib = jnp.sum(per_head, axis=0)                          # (S, D) f32

    # f32 scratch accumulation; out_ref is written exactly once.
    @pl.when(g == 0)
    def _():
        acc_ref[...] = contrib

    @pl.when(g > 0)
    def _():
        acc_ref[...] = acc_ref[...] + contrib

    @pl.when(g == pl.num_programs(1) - 1)
    def _():
        out_ref[0] = (acc_ref[...] + bo_ref[...]).astype(out_ref.dtype)


def _vmem_estimate_bytes(hb, hd, S, D, want_attw, out_itemsize):
    """Rough per-grid-step VMEM footprint (double-buffered I/O + f32 temps)."""
    cols = hb * hd
    bf, f32 = 2, 4
    io = 2 * (D * 3 * cols * bf + 3 * cols * f32        # wqkv + bqkv (dbuf)
              + hb * hd * D * bf + D * f32              # wo3 + bo (dbuf)
              + S * D * bf                              # x (dbuf)
              + S * D * out_itemsize)                   # out (dbuf)
    if want_attw:
        io += 2 * hb * S * S * bf
    scratch = S * D * f32
    temps = (S * 3 * cols * (f32 + bf)                  # qkv f32 + qkv_bf
             + 3 * hb * S * hd * bf                     # q3/k3/v3
             + hb * S * S * (2 * f32 + bf)              # scores/e + w_bf
             + hb * S * D * f32                         # per-head partials
             + S * D * f32)                             # contrib
    return io + scratch + temps


def _vmem_capacity_bytes():
    try:
        return int(pltpu.get_tpu_info().vmem_capacity_bytes)
    except Exception:
        return 64 * 1024 * 1024   # conservative (v7x per-TC VMEM)


def _aligned(hb, hd, H):
    # Lane alignment needed for the per-group QKV column slab (tiled path).
    return hb == H or (3 * hb * hd) % 128 == 0


def _pick_head_block(H, hd, S, D, want_attw, out_itemsize, budget):
    divisors = [d for d in range(H, 0, -1) if H % d == 0]
    for hb in divisors:
        if _aligned(hb, hd, H) and \
           _vmem_estimate_bytes(hb, hd, S, D, want_attw, out_itemsize) <= budget:
            return hb
    # Fall back to the smallest aligned divisor (may spill; better than failing).
    for hb in reversed(divisors):
        if _aligned(hb, hd, H):
            return hb
    return H


def siglip_attention(x, params, num_heads, *, head_block=None,
                     return_attn_weights=True,
                     attn_weights_dtype=jnp.bfloat16):
    """x: (B, S, D) float32/bf16.  params: PyTorch-convention Linear params.

    Returns (attn_output (B,S,D), attn_weights (B,H,S,S) or None).
    Attention weights are post-approx-reciprocal softmax values stored in
    `attn_weights_dtype` (bf16 default) -- fine for inspection, not for
    numerically sensitive reuse.
    """
    B, S, D = x.shape
    H = num_heads
    assert D % H == 0
    hd = D // H
    scale = hd ** -0.5
    f32, bf16 = jnp.float32, jnp.bfloat16
    out_itemsize = jnp.dtype(x.dtype).itemsize

    cap = _vmem_capacity_bytes()
    if head_block is None:
        hb = _pick_head_block(H, hd, S, D, return_attn_weights, out_itemsize,
                              budget=int(0.7 * cap))
    else:
        hb = head_block
    assert H % hb == 0, "head_block must divide num_heads"
    G = H // hb
    cols = hb * hd
    if G > 1:
        assert (3 * cols) % 128 == 0, (
            "3 * head_block * head_dim must be a multiple of 128 for the tiled "
            "head-group path (lane tiling of the fused QKV weight slab); "
            f"got {3 * cols}. Use a larger head_block or head_block=num_heads.")

    # PyTorch Linear: y = x @ W.T + b with W (out, in).  Pre-transpose to
    # (in, out), fold the softmax scale into the Q projection, regroup the
    # fused QKV weight per head group as [q|k|v], cast MXU operands to bf16
    # (biases stay f32; they are added after the f32-accumulated matmul).
    def w_ghd(w_t):                       # (D, D) -> (D, G, hb, hd)
        return w_t.reshape(D, G, hb, hd)

    wq_t = (params["wq"] * scale).T
    wk_t = params["wk"].T
    wv_t = params["wv"].T
    wqkv = jnp.stack([w_ghd(wq_t), w_ghd(wk_t), w_ghd(wv_t)], axis=2)
    wqkv = wqkv.reshape(D, 3 * D).astype(bf16)             # (D, 3D), group-major

    def b_ghd(b):
        return b.reshape(G, hb, hd)
    bqkv = jnp.stack([b_ghd(params["bq"] * scale), b_ghd(params["bk"]),
                      b_ghd(params["bv"])], axis=1)
    bqkv = bqkv.reshape(1, 3 * D).astype(f32)               # (1, 3D)

    wo3 = params["wo"].T.reshape(H, hd, D).astype(bf16)     # (H, hd, D)
    bo = params["bo"].reshape(1, D).astype(f32)
    x_bf = x.astype(bf16)

    in_specs = [
        pl.BlockSpec((1, S, D), lambda b, g: (b, 0, 0)),        # x (resident over g)
        pl.BlockSpec((D, 3 * cols), lambda b, g: (0, g)),       # fused QKV weights
        pl.BlockSpec((1, 3 * cols), lambda b, g: (0, g)),       # fused QKV bias
        pl.BlockSpec((hb, hd, D), lambda b, g: (g, 0, 0)),      # W_out, per-head rows
        pl.BlockSpec((1, D), lambda b, g: (0, 0)),              # b_out
    ]
    out_shape = [jax.ShapeDtypeStruct((B, S, D), x.dtype)]
    out_specs = [pl.BlockSpec((1, S, D), lambda b, g: (b, 0, 0))]
    if return_attn_weights:
        out_shape.append(jax.ShapeDtypeStruct((B, H, S, S), attn_weights_dtype))
        out_specs.append(pl.BlockSpec((1, hb, S, S), lambda b, g: (b, g, 0, 0)))

    kernel = functools.partial(siglip_attn_kernel, head_block=hb, head_dim=hd,
                               have_attw=return_attn_weights)

    # Advisory cost hint for XLA scheduling around the custom call.
    flops = int(2 * B * (S * D * 3 * D            # fused QKV projection
                         + 2 * H * S * S * hd     # QK^T + P.V
                         + S * D * D))            # output projection
    transcendentals = int(B * H * S * S)          # exp
    bytes_accessed = int(B * S * D * 2            # x (bf16)
                         + B * G * (D * 3 * cols * 2 + hb * hd * D * 2)
                         + B * S * D * out_itemsize
                         + (B * H * S * S * jnp.dtype(attn_weights_dtype).itemsize
                            if return_attn_weights else 0))
    cost = pl.CostEstimate(flops=flops, transcendentals=transcendentals,
                           bytes_accessed=bytes_accessed)

    vmem_limit = int(min(0.9 * cap, 128 * 1024 * 1024))

    # NOTE(v5e): if profiling shows exposed weight DMA, pipeline_mode=
    # pl.Buffered(3) on the wqkv/wo3 specs hides it; do not deepen on v7x.
    outs = pl.pallas_call(
        kernel,
        grid=(B, G),
        in_specs=in_specs,
        out_specs=out_specs,
        out_shape=out_shape,
        scratch_shapes=[pltpu.VMEM((S, D), jnp.float32)],
        compiler_params=pltpu.CompilerParams(
            dimension_semantics=("parallel", "arbitrary"),
            vmem_limit_bytes=vmem_limit),
        cost_estimate=cost,
    )(x_bf, wqkv, bqkv, wo3, bo)

    if return_attn_weights:
        return outs[0], outs[1]
    return outs[0], None


def reference_attention(x, params, num_heads, mxu_dtype=jnp.bfloat16):
    """Plain-JAX reference mirroring the PyTorch forward pass.

    MXU operands are round-tripped through bf16 exactly as the kernel does,
    so the comparison only sees accumulation-order / approx-reciprocal noise.
    """
    B, S, D = x.shape
    H = num_heads
    hd = D // H
    scale = hd ** -0.5
    f32 = jnp.float32

    def mx(a):
        return a.astype(mxu_dtype).astype(f32)

    xq = mx(x)
    q = xq @ mx((params["wq"] * scale).T) + params["bq"] * scale
    k = xq @ mx(params["wk"].T) + params["bk"]
    v = xq @ mx(params["wv"].T) + params["bv"]

    q = q.reshape(B, S, H, hd).transpose(0, 2, 1, 3)
    k = k.reshape(B, S, H, hd).transpose(0, 2, 1, 3)
    v = v.reshape(B, S, H, hd).transpose(0, 2, 1, 3)

    scores = jnp.einsum("bhqd,bhkd->bhqk", mx(q), mx(k))
    w = jax.nn.softmax(scores.astype(f32), axis=-1)
    o = jnp.einsum("bhqk,bhkd->bhqd", mx(w), mx(v))
    o = o.transpose(0, 2, 1, 3).reshape(B, S, D)
    o = mx(o) @ mx(params["wo"].T) + params["bo"]
    return o, w


if __name__ == "__main__":
    # Small shapes consistent with the module: (batch, seq, hidden), 4 heads.
    B, S, D, H = 2, 8, 256, 4

    key = jax.random.PRNGKey(0)
    keys = jax.random.split(key, 9)
    x = jax.random.normal(keys[0], (B, S, D), dtype=jnp.float32)

    # Deterministic init (PyTorch Linear weight shape: (out, in)).
    init = lambda k, shape: (jax.random.normal(k, shape, dtype=jnp.float32)
                             * (1.0 / jnp.sqrt(D)))
    params = {
        "wq": init(keys[1], (D, D)), "bq": init(keys[2], (D,)),
        "wk": init(keys[3], (D, D)), "bk": init(keys[4], (D,)),
        "wv": init(keys[5], (D, D)), "bv": init(keys[6], (D,)),
        "wo": init(keys[7], (D, D)), "bo": init(keys[8], (D,)),
    }

    ref_out, ref_w = reference_attention(x, params, num_heads=H)

    # Tiled head-group path (2 heads / grid step) with bf16 attention weights.
    attn_out, attn_w = siglip_attention(x, params, num_heads=H, head_block=2,
                                        return_attn_weights=True)
    jax.block_until_ready((attn_out, attn_w))
    assert attn_out.shape == (B, S, D)
    assert attn_w.shape == (B, H, S, S)
    # Tolerances cover bf16 MXU operands, bf16 weight storage, approx recip.
    assert jnp.allclose(attn_out, ref_out, atol=1e-2, rtol=1e-2)
    assert jnp.allclose(attn_w.astype(jnp.float32), ref_w, atol=1e-2, rtol=1e-2)

    # Auto head_block (collapses to H for tiny shapes), attention weights
    # output dropped entirely (fast path).
    out2, none_w = siglip_attention(x, params, num_heads=H,
                                    return_attn_weights=False)
    jax.block_until_ready(out2)
    assert none_w is None
    assert jnp.allclose(out2, ref_out, atol=1e-2, rtol=1e-2)

    print("KERNEL_OK")
</pallas_src>

<mosaic_0001>
module attributes {stable_mosaic.version = 11 : i64} {
  func.func @siglip_attn_kernel(%arg0: i32, %arg1: i32, %arg2: memref<1x8x256xbf16, #tpu.memory_space<vmem>>, %arg3: memref<256x384xbf16, #tpu.memory_space<vmem>>, %arg4: memref<1x384xf32, #tpu.memory_space<vmem>>, %arg5: memref<2x64x256xbf16, #tpu.memory_space<vmem>>, %arg6: memref<1x256xf32, #tpu.memory_space<vmem>>, %arg7: memref<1x8x256xf32, #tpu.memory_space<vmem>>, %arg8: memref<1x2x8x8xbf16, #tpu.memory_space<vmem>>, %arg9: memref<8x256xf32, #tpu.memory_space<vmem>>) attributes {dimension_semantics = [#tpu.dimension_semantics<parallel>, #tpu.dimension_semantics<arbitrary>], iteration_bounds = array<i64: 2, 2>, scalar_prefetch = 0 : i64, scratch_operands = 1 : i64, tpu.core_type = #tpu.core_type<tc>, window_params = [{transform_indices = @transform_0, window_bounds = array<i64: 1, 8, 256>}, {transform_indices = @transform_1, window_bounds = array<i64: 256, 384>}, {transform_indices = @transform_2, window_bounds = array<i64: 1, 384>}, {transform_indices = @transform_3, window_bounds = array<i64: 2, 64, 256>}, {pipeline_mode = #tpu.pipeline_mode<synchronous>, transform_indices = @transform_4, window_bounds = array<i64: 1, 256>}, {transform_indices = @transform_5, window_bounds = array<i64: 1, 8, 256>}, {transform_indices = @transform_6, window_bounds = array<i64: 1, 2, 8, 8>}]} {
    %c0 = arith.constant 0 : index
    %c0_0 = arith.constant 0 : index
    %c0_1 = arith.constant 0 : index
    %0 = vector.load %arg2[%c0, %c0_0, %c0_1] : memref<1x8x256xbf16, #tpu.memory_space<vmem>>, vector<1x8x256xbf16>
    %1 = vector.shape_cast %0 : vector<1x8x256xbf16> to vector<8x256xbf16>
    %c0_2 = arith.constant 0 : index
    %c0_3 = arith.constant 0 : index
    %2 = vector.load %arg3[%c0_2, %c0_3] : memref<256x384xbf16, #tpu.memory_space<vmem>>, vector<256x384xbf16>
    %cst = arith.constant dense<0.000000e+00> : vector<8x384xf32>
    %3 = tpu.matmul %1, %2, %cst {dimension_numbers = #tpu.dot_dimension_numbers<[1], [0], [0], [1], [0, 0, 1, 1], [], []>} : vector<8x256xbf16>, vector<256x384xbf16>, vector<8x384xf32> -> vector<8x384xf32>
    %c0_4 = arith.constant 0 : index
    %c0_5 = arith.constant 0 : index
    %4 = vector.load %arg4[%c0_4, %c0_5] : memref<1x384xf32, #tpu.memory_space<vmem>>, vector<1x384xf32>
    %5 = vector.broadcast %4 : vector<1x384xf32> to vector<8x384xf32>
    %6 = arith.addf %3, %5 : vector<8x384xf32>
    %7 = arith.truncf %6 : vector<8x384xf32> to vector<8x384xbf16>
    %8 = vector.extract_strided_slice %7 {offsets = [0, 0], sizes = [8, 128], strides = [1, 1]} : vector<8x384xbf16> to vector<8x128xbf16>
    %9 = vector.shape_cast %8 : vector<8x128xbf16> to vector<8x2x64xbf16>
    %10 = tpu.transpose %9, [1, 0, 2] : vector<8x2x64xbf16> -> vector<2x8x64xbf16>
    %11 = vector.extract_strided_slice %7 {offsets = [0, 128], sizes = [8, 128], strides = [1, 1]} : vector<8x384xbf16> to vector<8x128xbf16>
    %12 = vector.shape_cast %11 : vector<8x128xbf16> to vector<8x2x64xbf16>
    %13 = tpu.transpose %12, [1, 0, 2] : vector<8x2x64xbf16> -> vector<2x8x64xbf16>
    %14 = vector.extract_strided_slice %7 {offsets = [0, 256], sizes = [8, 128], strides = [1, 1]} : vector<8x384xbf16> to vector<8x128xbf16>
    %15 = vector.shape_cast %14 : vector<8x128xbf16> to vector<8x2x64xbf16>
    %16 = tpu.transpose %15, [1, 0, 2] : vector<8x2x64xbf16> -> vector<2x8x64xbf16>
    "tpu.trace_start"() <{level = 10 : i32, message = "hqd,hkd->hqk"}> : () -> ()
    %cst_6 = arith.constant dense<0.000000e+00> : vector<2x8x8xf32>
    %17 = tpu.matmul %10, %13, %cst_6 {dimension_numbers = #tpu.dot_dimension_numbers<[2], [2], [1], [1], [0, 0, 0, 1, 1, 1], [0], [0]>} : vector<2x8x64xbf16>, vector<2x8x64xbf16>, vector<2x8x8xf32> -> vector<2x8x8xf32>
    "tpu.trace_stop"() : () -> ()
    %cst_7 = arith.constant dense<0xFF800000> : vector<2x8xf32>
    %18 = vector.multi_reduction <maximumf>, %17, %cst_7 [2] : vector<2x8x8xf32> to vector<2x8xf32>
    %19 = vector.shape_cast %18 : vector<2x8xf32> to vector<2x8x1xf32>
    %20 = vector.broadcast %19 : vector<2x8x1xf32> to vector<2x8x8xf32>
    %21 = arith.subf %17, %20 : vector<2x8x8xf32>
    %22 = math.exp %21 : vector<2x8x8xf32>
    %cst_8 = arith.constant dense<0.000000e+00> : vector<2x8xf32>
    %23 = vector.multi_reduction <add>, %22, %cst_8 [2] : vector<2x8x8xf32> to vector<2x8xf32>
    %24 = vector.shape_cast %23 : vector<2x8xf32> to vector<2x8x1xf32>
    %25 = tpu.reciprocal %24 {approx = true} : vector<2x8x1xf32> -> vector<2x8x1xf32>
    %26 = vector.broadcast %25 : vector<2x8x1xf32> to vector<2x8x8xf32>
    %27 = arith.mulf %22, %26 : vector<2x8x8xf32>
    %28 = arith.truncf %27 : vector<2x8x8xf32> to vector<2x8x8xbf16>
    %c0_9 = arith.constant 0 : index
    %c0_10 = arith.constant 0 : index
    %c0_11 = arith.constant 0 : index
    %c0_12 = arith.constant 0 : index
    %29 = vector.load %arg8[%c0_9, %c0_10, %c0_11, %c0_12] : memref<1x2x8x8xbf16, #tpu.memory_space<vmem>>, vector<1x2x8x8xbf16>
    %30 = vector.shape_cast %29 : vector<1x2x8x8xbf16> to vector<2x8x8xbf16>
    %31 = vector.shape_cast %28 : vector<2x8x8xbf16> to vector<1x2x8x8xbf16>
    tpu.vector_store %arg8[%c0_9, %c0_10, %c0_11, %c0_12], %31 {strides = array<i32>} : memref<1x2x8x8xbf16, #tpu.memory_space<vmem>>, vector<1x2x8x8xbf16>,
    "tpu.trace_start"() <{level = 10 : i32, message = "hqk,hkd->hqd"}> : () -> ()
    %cst_13 = arith.constant dense<0.000000e+00> : vector<2x8x64xf32>
    %32 = tpu.matmul %28, %16, %cst_13 {dimension_numbers = #tpu.dot_dimension_numbers<[2], [1], [1], [2], [0, 0, 0, 1, 1, 2], [0], [0]>} : vector<2x8x8xbf16>, vector<2x8x64xbf16>, vector<2x8x64xf32> -> vector<2x8x64xf32>
    "tpu.trace_stop"() : () -> ()
    %33 = arith.truncf %32 : vector<2x8x64xf32> to vector<2x8x64xbf16>
    %c0_14 = arith.constant 0 : index
    %c0_15 = arith.constant 0 : index
    %c0_16 = arith.constant 0 : index
    %34 = vector.load %arg5[%c0_14, %c0_15, %c0_16] : memref<2x64x256xbf16, #tpu.memory_space<vmem>>, vector<2x64x256xbf16>
    "tpu.trace_start"() <{level = 10 : i32, message = "hqd,hde->hqe"}> : () -> ()
    %cst_17 = arith.constant dense<0.000000e+00> : vector<2x8x256xf32>
    %35 = tpu.matmul %33, %34, %cst_17 {dimension_numbers = #tpu.dot_dimension_numbers<[2], [1], [1], [2], [0, 0, 0, 1, 1, 2], [0], [0]>} : vector<2x8x64xbf16>, vector<2x64x256xbf16>, vector<2x8x256xf32> -> vector<2x8x256xf32>
    "tpu.trace_stop"() : () -> ()
    %cst_18 = arith.constant dense<0.000000e+00> : vector<8x256xf32>
    %36 = vector.multi_reduction <add>, %35, %cst_18 [0] : vector<2x8x256xf32> to vector<8x256xf32>
    %c0_i32 = arith.constant 0 : i32
    %37 = arith.cmpi eq, %arg1, %c0_i32 : i32
    %38 = arith.extui %37 : i1 to i32
    %c0_i32_19 = arith.constant 0 : i32
    %39 = arith.cmpi ne, %38, %c0_i32_19 : i32
    scf.if %39 {
      %c0_23 = arith.constant 0 : index
      %c0_24 = arith.constant 0 : index
      %46 = vector.load %arg9[%c0_23, %c0_24] : memref<8x256xf32, #tpu.memory_space<vmem>>, vector<8x256xf32>
      tpu.vector_store %arg9[%c0_23, %c0_24], %36 {strides = array<i32>} : memref<8x256xf32, #tpu.memory_space<vmem>>, vector<8x256xf32>,
    } else {
    }
    %c0_i32_20 = arith.constant 0 : i32
    %40 = arith.cmpi sgt, %arg1, %c0_i32_20 : i32
    %41 = arith.extui %40 : i1 to i32
    %c0_i32_21 = arith.constant 0 : i32
    %42 = arith.cmpi ne, %41, %c0_i32_21 : i32
    scf.if %42 {
      %c0_23 = arith.constant 0 : index
      %c0_24 = arith.constant 0 : index
      %46 = vector.load %arg9[%c0_23, %c0_24] : memref<8x256xf32, #tpu.memory_space<vmem>>, vector<8x256xf32>
      %47 = arith.addf %46, %36 : vector<8x256xf32>
      %c0_25 = arith.constant 0 : index
      %c0_26 = arith.constant 0 : index
      %48 = vector.load %arg9[%c0_25, %c0_26] : memref<8x256xf32, #tpu.memory_space<vmem>>, vector<8x256xf32>
      tpu.vector_store %arg9[%c0_25, %c0_26], %47 {strides = array<i32>} : memref<8x256xf32, #tpu.memory_space<vmem>>, vector<8x256xf32>,
    } else {
    }
    %c1_i32 = arith.constant 1 : i32
    %43 = arith.cmpi eq, %arg1, %c1_i32 : i32
    %44 = arith.extui %43 : i1 to i32
    %c0_i32_22 = arith.constant 0 : i32
    %45 = arith.cmpi ne, %44, %c0_i32_22 : i32
    scf.if %45 {
      %c0_23 = arith.constant 0 : index
      %c0_24 = arith.constant 0 : index
      %46 = vector.load %arg9[%c0_23, %c0_24] : memref<8x256xf32, #tpu.memory_space<vmem>>, vector<8x256xf32>
      %c0_25 = arith.constant 0 : index
      %c0_26 = arith.constant 0 : index
      %47 = vector.load %arg6[%c0_25, %c0_26] : memref<1x256xf32, #tpu.memory_space<vmem>>, vector<1x256xf32>
      %48 = vector.broadcast %47 : vector<1x256xf32> to vector<8x256xf32>
      %49 = arith.addf %46, %48 : vector<8x256xf32>
      %c0_27 = arith.constant 0 : index
      %c0_28 = arith.constant 0 : index
      %c0_29 = arith.constant 0 : index
      %50 = vector.load %arg7[%c0_27, %c0_28, %c0_29] : memref<1x8x256xf32, #tpu.memory_space<vmem>>, vector<1x8x256xf32>
      %51 = vector.shape_cast %50 : vector<1x8x256xf32> to vector<8x256xf32>
      %52 = vector.shape_cast %49 : vector<8x256xf32> to vector<1x8x256xf32>
      tpu.vector_store %arg7[%c0_27, %c0_28, %c0_29], %52 {strides = array<i32>} : memref<1x8x256xf32, #tpu.memory_space<vmem>>, vector<1x8x256xf32>,
    } else {
    }
    return
  }
  func.func @transform_0(%arg0: i32, %arg1: i32) -> (i32, i32, i32) {
    %c0_i32 = arith.constant 0 : i32
    %c0_i32_0 = arith.constant 0 : i32
    %c0_i32_1 = arith.constant 0 : i32
    return %arg0, %c0_i32, %c0_i32_0 : i32, i32, i32
  }
  func.func @transform_1(%arg0: i32, %arg1: i32) -> (i32, i32) {
    %c0_i32 = arith.constant 0 : i32
    %c0_i32_0 = arith.constant 0 : i32
    return %c0_i32, %arg1 : i32, i32
  }
  func.func @transform_2(%arg0: i32, %arg1: i32) -> (i32, i32) {
    %c0_i32 = arith.constant 0 : i32
    %c0_i32_0 = arith.constant 0 : i32
    return %c0_i32, %arg1 : i32, i32
  }
  func.func @transform_3(%arg0: i32, %arg1: i32) -> (i32, i32, i32) {
    %c0_i32 = arith.constant 0 : i32
    %c0_i32_0 = arith.constant 0 : i32
    %c0_i32_1 = arith.constant 0 : i32
    return %arg1, %c0_i32, %c0_i32_0 : i32, i32, i32
  }
  func.func @transform_4(%arg0: i32, %arg1: i32) -> (i32, i32) {
    %c0_i32 = arith.constant 0 : i32
    %c0_i32_0 = arith.constant 0 : i32
    %c0_i32_1 = arith.constant 0 : i32
    return %c0_i32, %c0_i32_0 : i32, i32
  }
  func.func @transform_5(%arg0: i32, %arg1: i32) -> (i32, i32, i32) {
    %c0_i32 = arith.constant 0 : i32
    %c0_i32_0 = arith.constant 0 : i32
    %c0_i32_1 = arith.constant 0 : i32
    return %arg0, %c0_i32, %c0_i32_0 : i32, i32, i32
  }
  func.func @transform_6(%arg0: i32, %arg1: i32) -> (i32, i32, i32, i32) {
    %c0_i32 = arith.constant 0 : i32
    %c0_i32_0 = arith.constant 0 : i32
    %c0_i32_1 = arith.constant 0 : i32
    return %arg0, %arg1, %c0_i32, %c0_i32_0 : i32, i32, i32, i32
  }
}

</mosaic_0001>

<llo_original>
// kernel: tpu_custom_call.1
$region0: #{tpu_custom_call.1}
  #allocation0 [shape = 'u32[]', space=smem, size = 0x4, offset = 0x4, fixed_abs, tag = 'smem constant byte address 0x4 - core index']
  #allocation1 [shape = 'u32[144,128]{1,0:T(1,128)}', space=vmem, size = 0x12000, scoped, tag = 'internal scratch']
  #allocation2 [shape = 'f32[8,256]{1,0:T(8,128)}', space=vmem, size = 0x2000, scoped, tag = 'scratch operand']
  %s0 = inlined_call_operand.hbm [shape: bf16[2,8,256], index: 0, kind: input, shape index: {}]
  %s1 = inlined_call_operand.hbm [shape: bf16[256,768], index: 1, kind: input, shape index: {}]
  %s2 = inlined_call_operand.vmem [shape: f32[1,768], index: 2, kind: input, shape index: {}]
  %s3 = inlined_call_operand.hbm [shape: bf16[4,64,256], index: 3, kind: input, shape index: {}]
  %s4 = inlined_call_operand.vmem [shape: f32[1,256], index: 4, kind: input, shape index: {}]
  %s5 = inlined_call_operand.hbm [shape: f32[2,8,256], index: 5, kind: output, shape index: {0}]
  %s6 = inlined_call_operand.hbm [shape: bf16[2,4,8,8], index: 6, kind: output, shape index: {1}]
  %7 = xla_tuple %s5, %s6
  %s8 = sld [smem:[#allocation0]]
  $region85: #{tpu_custom_call.1} parent=0
    _
  %s10 = ssub.s32 1, %s8
  %s11 = scalar_select 0, %s10, %s8
  $region1: #{tpu_custom_call.1} parent=0
    #allocation3 [shape = 'u8[8192]{0}', space=vmem, size = 0x2000, scoped, tag = 'input window, operand 0']
    #allocation4 [shape = 's32[2]{0}', space=sflag, size = 0x8, scoped, tag = 'scoped memory for tpu_custom_call.1']
    #allocation5 [shape = 's32[2]{0}', space=sflag, size = 0x8, scoped, tag = 'scoped memory for tpu_custom_call.1']
    #allocation6 [shape = 'u8[393216]{0}', space=vmem, size = 0x60000, scoped, tag = 'input window, operand 1']
    #allocation7 [shape = 's32[2]{0}', space=sflag, size = 0x8, scoped, tag = 'scoped memory for tpu_custom_call.1']
    #allocation8 [shape = 'u8[131072]{0}', space=vmem, size = 0x20000, scoped, tag = 'input window, operand 3']
    #allocation9 [shape = 'u8[16384]{0}', space=vmem, size = 0x4000, scoped, tag = 'output window, operand 0']
    #allocation10 [shape = 'u8[8192]{0}', space=vmem, size = 0x2000, scoped, tag = 'output window, operand 1']
    #allocation11 [shape = 's32[2]{0}', space=sflag, size = 0x8, scoped, tag = 'scoped memory for tpu_custom_call.1']
    %12 = vsyncpa [#allocation4], 0
    %s13 = scalar_lea.sflag [#allocation4], 1
    %14 = vsyncpa %s13, 0
    %15 = vsyncpa [#allocation7], 0
    %s16 = scalar_lea.sflag [#allocation7], 1
    %17 = vsyncpa %s16, 0
    %18 = vsyncpa [#allocation5], 0
    %s19 = scalar_lea.sflag [#allocation5], 1
    %20 = vsyncpa %s19, 0
    %21 = vsyncpa [#allocation11], 0
    %s22 = scalar_lea.sflag [#allocation11], 1
    %23 = vsyncpa %s22, 0
    loop: start=0, step=1, limit=6
    $region2: #{tpu_custom_call.1} parent=1 // loop_pre_header
      _
    $region3: #{tpu_custom_call.1} parent=1 // loop_header
      %s25 = sphi 0, %s29
      %p26 = scmp.ge.s32.totalorder %s25, 6
      %s32 = sphi 0, %s44
      %s33 = sphi 0, %s40
      %s34 = sphi 0, %s32
      %s35 = sphi 0, %s33
      %s36 = sphi 0, %s34
      %s37 = sphi 0, %s35
      %s47 = sphi 0, %s49
      %s50 = sphi 0, %s47
      %s51 = sphi 0, %s50
      %s67 = sphi 0, %s51
      %s73 = sphi 0, %s75
      %s76 = sphi 0, %s73
      %s77 = sphi 0, %s76
      %s93 = sphi 0, %s77
      %s99 = sphi 0, %s101
      %s102 = sphi 0, %s99
      %s103 = sphi 0, %s102
      %s119 = sphi 0, %s103
      %s125 = sphi 0, %s127
      %s128 = sphi 0, %s125
      %s129 = sphi 0, %s128
      %s145 = sphi 0, %s129
      %s149 = sphi 0, %s149
      %s151 = sphi 0, %s149
      %s152 = sphi 0, %s151
      %s166 = sphi 0, %s152
      %s172 = sphi 0, %s174
      %s175 = sphi 0, %s172
      %s176 = sphi 0, %s175
      %s192 = sphi 0, %s176
      %s200 = sphi 0, %s202
      %s203 = sphi 0, %s200
      %s204 = sphi 0, %s203
      %s220 = sphi 0, %s204
    $region4: #{tpu_custom_call.1} parent=1 // loop_header_branch
      %28 = sbr.rel (%p26) target = $region8
    $region5: #{tpu_custom_call.1} parent=1 // loop_body
      %s30 = ssub.s32 %s25, 1
      %s31 = ssub.s32 %s25, 2
      %s38 = sadd.s32 1, %s33
      %p39 = scmp.ge.s32.totalorder %s38, 2
      %s40 = scalar_select %p39, 0, %s38
      %s41 = sadd.s32 1, %s32
      %s42 = scalar_select %p39, %s41, %s32
      %p43 = scmp.ge.s32.totalorder %s42, 2
      %s44 = scalar_select %p43, 0, %s42
      %s45 = ssub.s32 %s32, %s44
      %p46 = scmp.eq.s32.totalorder %s45, 0
      %s48 = sadd.s32 %s47, 1
      %s49 = scalar_select %p46, %s47, %s48
      %p52 = pneg %p46
      %p53 = scmp.eq.s32.totalorder %s25, 3
      %p54 = por %p52, %p53
      %p55 = scmp.ne.s32.totalorder %s47, %s50
      %p56 = scmp.eq.s32.totalorder %s25, 0
      %p57 = por %p55, %p56
      %p58 = scmp.ne.s32.totalorder %s47, %s50
      %p59 = scmp.eq.s32.totalorder %s30, 3
      %p60 = por %p58, %p59
      %p61 = scmp.ne.s32.totalorder %s50, %s51
      %p62 = scmp.eq.s32.totalorder %s30, 0
      %p63 = por %p61, %p62
      %p64 = scmp.ne.s32.totalorder %s50, %s51
      %p65 = scmp.eq.s32.totalorder %s31, 3
      %p66 = por %p64, %p65
      %p68 = scmp.ne.s32.totalorder %s51, %s67
      %p69 = scmp.eq.s32.totalorder %s31, 0
      %p70 = por %p68, %p69
      %s71 = ssub.s32 %s33, %s40
      %p72 = scmp.eq.s32.totalorder %s71, 0
      %s74 = sadd.s32 %s73, 1
      %s75 = scalar_select %p72, %s73, %s74
      %p78 = pneg %p72
      %p79 = scmp.eq.s32.totalorder %s25, 3
      %p80 = por %p78, %p79
      %p81 = scmp.ne.s32.totalorder %s73, %s76
      %p82 = scmp.eq.s32.totalorder %s25, 0
      %p83 = por %p81, %p82
      %p84 = scmp.ne.s32.totalorder %s73, %s76
      %p85 = scmp.eq.s32.totalorder %s30, 3
      %p86 = por %p84, %p85
      %p87 = scmp.ne.s32.totalorder %s76, %s77
      %p88 = scmp.eq.s32.totalorder %s30, 0
      %p89 = por %p87, %p88
      %p90 = scmp.ne.s32.totalorder %s76, %s77
      %p91 = scmp.eq.s32.totalorder %s31, 3
      %p92 = por %p90, %p91
      %p94 = scmp.ne.s32.totalorder %s77, %s93
      %p95 = scmp.eq.s32.totalorder %s31, 0
      %p96 = por %p94, %p95
      %s97 = ssub.s32 %s33, %s40
      %p98 = scmp.eq.s32.totalorder %s97, 0
      %s100 = sadd.s32 %s99, 1
      %s101 = scalar_select %p98, %s99, %s100
      %p104 = pneg %p98
      %p105 = scmp.eq.s32.totalorder %s25, 3
      %p106 = por %p104, %p105
      %p107 = scmp.ne.s32.totalorder %s99, %s102
      %p108 = scmp.eq.s32.totalorder %s25, 0
      %p109 = por %p107, %p108
      %p110 = scmp.ne.s32.totalorder %s99, %s102
      %p111 = scmp.eq.s32.totalorder %s30, 3
      %p112 = por %p110, %p111
      %p113 = scmp.ne.s32.totalorder %s102, %s103
      %p114 = scmp.eq.s32.totalorder %s30, 0
      %p115 = por %p113, %p114
      %p116 = scmp.ne.s32.totalorder %s102, %s103
      %p117 = scmp.eq.s32.totalorder %s31, 3
      %p118 = por %p116, %p117
      %p120 = scmp.ne.s32.totalorder %s103, %s119
      %p121 = scmp.eq.s32.totalorder %s31, 0
      %p122 = por %p120, %p121
      %s123 = ssub.s32 %s33, %s40
      %p124 = scmp.eq.s32.totalorder %s123, 0
      %s126 = sadd.s32 %s125, 1
      %s127 = scalar_select %p124, %s125, %s126
      %p130 = pneg %p124
      %p131 = scmp.eq.s32.totalorder %s25, 3
      %p132 = por %p130, %p131
      %p133 = scmp.ne.s32.totalorder %s125, %s128
      %p134 = scmp.eq.s32.totalorder %s25, 0
      %p135 = por %p133, %p134
      %p136 = scmp.ne.s32.totalorder %s125, %s128
      %p137 = scmp.eq.s32.totalorder %s30, 3
      %p138 = por %p136, %p137
      %p139 = scmp.ne.s32.totalorder %s128, %s129
      %p140 = scmp.eq.s32.totalorder %s30, 0
      %p141 = por %p139, %p140
      %p142 = scmp.ne.s32.totalorder %s128, %s129
      %p143 = scmp.eq.s32.totalorder %s31, 3
      %p144 = por %p142, %p143
      %p146 = scmp.ne.s32.totalorder %s129, %s145
      %p147 = scmp.eq.s32.totalorder %s31, 0
      %p148 = por %p146, %p147
      %s150 = sadd.s32 %s149, 1
      %p153 = scmp.eq.s32.totalorder %s25, 3
      %p154 = scmp.ne.s32.totalorder %s149, %s151
      %p155 = scmp.eq.s32.totalorder %s25, 0
      %p156 = por %p154, %p155
      %p157 = scmp.ne.s32.totalorder %s149, %s151
      %p158 = scmp.eq.s32.totalorder %s30, 3
      %p159 = por %p157, %p158
      %p160 = scmp.ne.s32.totalorder %s151, %s152
      %p161 = scmp.eq.s32.totalorder %s30, 0
      %p162 = por %p160, %p161
      %p163 = scmp.ne.s32.totalorder %s151, %s152
      %p164 = scmp.eq.s32.totalorder %s31, 3
      %p165 = por %p163, %p164
      %p167 = scmp.ne.s32.totalorder %s152, %s166
      %p168 = scmp.eq.s32.totalorder %s31, 0
      %p169 = por %p167, %p168
      %s170 = ssub.s32 %s32, %s44
      %p171 = scmp.eq.s32.totalorder %s170, 0
      %s173 = sadd.s32 %s172, 1
      %s174 = scalar_select %p171, %s172, %s173
      %p177 = pneg %p171
      %p178 = scmp.eq.s32.totalorder %s25, 3
      %p179 = por %p177, %p178
      %p180 = scmp.ne.s32.totalorder %s172, %s175
      %p181 = scmp.eq.s32.totalorder %s25, 0
      %p182 = por %p180, %p181
      %p183 = scmp.ne.s32.totalorder %s172, %s175
      %p184 = scmp.eq.s32.totalorder %s30, 3
      %p185 = por %p183, %p184
      %p186 = scmp.ne.s32.totalorder %s175, %s176
      %p187 = scmp.eq.s32.totalorder %s30, 0
      %p188 = por %p186, %p187
      %p189 = scmp.ne.s32.totalorder %s175, %s176
      %p190 = scmp.eq.s32.totalorder %s31, 3
      %p191 = por %p189, %p190
      %p193 = scmp.ne.s32.totalorder %s176, %s192
      %p194 = scmp.eq.s32.totalorder %s31, 0
      %p195 = por %p193, %p194
      %s196 = ssub.s32 %s32, %s44
      %s197 = ssub.s32 %s33, %s40
      %s198 = sor.u32 %s196, %s197
      %p199 = scmp.eq.s32.totalorder %s198, 0
      %s201 = sadd.s32 %s200, 1
      %s202 = scalar_select %p199, %s200, %s201
      %p205 = pneg %p199
      %p206 = scmp.eq.s32.totalorder %s25, 3
      %p207 = por %p205, %p206
      %p208 = scmp.ne.s32.totalorder %s200, %s203
      %p209 = scmp.eq.s32.totalorder %s25, 0
      %p210 = por %p208, %p209
      %p211 = scmp.ne.s32.totalorder %s200, %s203
      %p212 = scmp.eq.s32.totalorder %s30, 3
      %p213 = por %p211, %p212
      %p214 = scmp.ne.s32.totalorder %s203, %s204
      %p215 = scmp.eq.s32.totalorder %s30, 0
      %p216 = por %p214, %p215
      %p217 = scmp.ne.s32.totalorder %s203, %s204
      %p218 = scmp.eq.s32.totalorder %s31, 3
      %p219 = por %p217, %p218
      %p221 = scmp.ne.s32.totalorder %s204, %s220
      %p222 = scmp.eq.s32.totalorder %s31, 0
      %p223 = por %p221, %p222
      %p224 = scmp.le.s32.totalorder 1, %s25
      %p225 = scmp.lt.s32.totalorder %s25, 5
      %p226 = pnand %p224, %p225
      %p227 = pneg %p226
      // Predicated region
      $region9: #{tpu_custom_call.1} parent=5 // pred_check
        _
      $region10: #{tpu_custom_call.1} parent=5 // pred_check_branch
        %229 = sbr.rel (%p226) target = $region12
      $region11: #{tpu_custom_call.1} parent=5 // pred_region
        %s230 = ssub.s32 %s25, 1
        // Predicated region
        $region13: #{tpu_custom_call.1} parent=11 // pred_check
          %p231 = pneg %p162
        $region14: #{tpu_custom_call.1} parent=11 // pred_check_branch
          %233 = sbr.rel (%p231) target = $region16
        $region15: #{tpu_custom_call.1} parent=11 // pred_region
          _
        $region16: #{tpu_custom_call.1} parent=11 // pred_fallthru
          _
      $region12: #{tpu_custom_call.1} parent=5 // pred_fallthru
        _
      %p234 = scmp.lt.s32.totalorder %s25, 4
      // Predicated region
      $region17: #{tpu_custom_call.1} parent=5 // pred_check
        %p235 = pneg %p234
      $region18: #{tpu_custom_call.1} parent=5 // pred_check_branch
        %237 = sbr.rel (%p235) target = $region20
      $region19: #{tpu_custom_call.1} parent=5 // pred_region
        // Predicated region
        $region21: #{tpu_custom_call.1} parent=19 // pred_check
          %p238 = pneg %p57
        $region22: #{tpu_custom_call.1} parent=19 // pred_check_branch
          %240 = sbr.rel (%p238) target = $region24
        $region23: #{tpu_custom_call.1} parent=19 // pred_region
          %s241 = sand.u32 %s47, 1
          %s242 = scalar_lea.sflag [#allocation4], %s241
          %s243 = sand.u32 %s47, 1
          %s244 = smul.addr %s243, 8
          %s245 = scalar_lea.vmem [#allocation3], %s244
          %s247 = ssub.s32 128, 128
          %248 = vsyncadd %s242, %s247
          %s249 = smul.addr %s32, 2
          %s250 = smul.addr %s249, 64
          %s251 = scalar_lea.hbm %s0, %s250
          %s253 = sshll.u32 %s245, 4
          %s254 = int_to_ptr.vmem [resolvable:$true] %s253
          %256 = dma.hbm_to_vmem [thread:$0]  %s251, 128, %s254, %s242
        $region24: #{tpu_custom_call.1} parent=19 // pred_fallthru
          _
        // Predicated region
        $region25: #{tpu_custom_call.1} parent=19 // pred_check
          %p257 = pneg %p83
        $region26: #{tpu_custom_call.1} parent=19 // pred_check_branch
          %259 = sbr.rel (%p257) target = $region28
        $region27: #{tpu_custom_call.1} parent=19 // pred_region
          %s260 = sand.u32 %s25, 1
          %s261 = scalar_lea.sflag [#allocation7], %s260
          %s262 = sand.u32 %s73, 1
          %s263 = smul.addr %s262, 384
          %s264 = scalar_lea.vmem [#allocation6], %s263
          %s265 = smul.u32 3, %s33
          %s267 = ssub.s32 6144, 6144
          %268 = vsyncadd %s261, %s267
          %s269 = smul.addr %s265, 64
          %s270 = scalar_lea.hbm %s1, %s269
          %s271 = sshll.u32 %s264, 4
          %s272 = int_to_ptr.vmem [resolvable:$true] %s271
          %277 = dma.hbm_to_vmem [thread:$0]  %s270, 6144, %s272, %s261, 384, 192, 12
        $region28: #{tpu_custom_call.1} parent=19 // pred_fallthru
          _
        // Predicated region
        $region29: #{tpu_custom_call.1} parent=19 // pred_check
          %p278 = pneg %p109
        $region30: #{tpu_custom_call.1} parent=19 // pred_check_branch
          %280 = sbr.rel (%p278) target = $region32
        $region31: #{tpu_custom_call.1} parent=19 // pred_region
          %s281 = smul.u32 3, %s33
          %p282 = scmp.lt.s32.totalorder %s281, 5
          %s283 = scalar_select %p282, %s281, 5
          %s284 = scalar_lea.vmem %s2, %s283
          %s285 = smul.u32 3, %s33
        $region32: #{tpu_custom_call.1} parent=19 // pred_fallthru
          _
        // Predicated region
        $region33: #{tpu_custom_call.1} parent=19 // pred_check
          %p286 = pneg %p135
        $region34: #{tpu_custom_call.1} parent=19 // pred_check_branch
          %288 = sbr.rel (%p286) target = $region36
        $region35: #{tpu_custom_call.1} parent=19 // pred_region
          %s289 = sand.u32 %s25, 1
          %s290 = scalar_lea.sflag [#allocation7], %s289
          %s291 = sand.u32 %s125, 1
          %s292 = smul.addr %s291, 128
          %s293 = scalar_lea.vmem [#allocation8], %s292
          %s294 = smul.u32 2, %s33
          %s296 = ssub.s32 2048, 2048
          %297 = vsyncadd %s290, %s296
          %s298 = smul.addr %s294, 16
          %s299 = smul.addr %s298, 64
          %s300 = scalar_lea.hbm %s3, %s299
          %s301 = sshll.u32 %s293, 4
          %s302 = int_to_ptr.vmem [resolvable:$true] %s301
          %307 = dma.hbm_to_vmem [thread:$0]  %s300, 2048, %s302, %s290, 128, 128, 8
        $region36: #{tpu_custom_call.1} parent=19 // pred_fallthru
          _
      $region20: #{tpu_custom_call.1} parent=5 // pred_fallthru
        _
      %p308 = scmp.le.s32.totalorder 1, %s25
      %p309 = scmp.lt.s32.totalorder %s25, 5
      %p310 = pnand %p308, %p309
      %p311 = pneg %p310
      // Predicated region
      $region37: #{tpu_custom_call.1} parent=5 // pred_check
        _
      $region38: #{tpu_custom_call.1} parent=5 // pred_check_branch
        %313 = sbr.rel (%p310) target = $region40
      $region39: #{tpu_custom_call.1} parent=5 // pred_region
        %s314 = ssub.s32 %s25, 1
        %s315 = sand.u32 %s50, 1
        %s316 = scalar_lea.sflag [#allocation4], %s315
        %s317 = sand.u32 %s50, 1
        %s318 = smul.addr %s317, 8
        %s319 = scalar_lea.vmem [#allocation3], %s318
        // Predicated region
        $region41: #{tpu_custom_call.1} parent=39 // pred_check
          %p320 = pneg %p63
        $region42: #{tpu_custom_call.1} parent=39 // pred_check_branch
          %322 = sbr.rel (%p320) target = $region44
        $region43: #{tpu_custom_call.1} parent=39 // pred_region
          %323 = dma.done %s316, 128
        $region44: #{tpu_custom_call.1} parent=39 // pred_fallthru
          _
        %s324 = sand.u32 %s30, 1
        %s325 = scalar_lea.sflag [#allocation7], %s324
        %s326 = sand.u32 %s76, 1
        %s327 = smul.addr %s326, 384
        %s328 = scalar_lea.vmem [#allocation6], %s327
        // Predicated region
        $region45: #{tpu_custom_call.1} parent=39 // pred_check
          %p329 = pneg %p89
        $region46: #{tpu_custom_call.1} parent=39 // pred_check_branch
          %331 = sbr.rel (%p329) target = $region48
        $region47: #{tpu_custom_call.1} parent=39 // pred_region
          %332 = dma.done %s325, 6144
        $region48: #{tpu_custom_call.1} parent=39 // pred_fallthru
          _
        %s333 = sand.u32 %s30, 1
        %s334 = scalar_lea.sflag [#allocation7], %s333
        %s335 = sand.u32 %s128, 1
        %s336 = smul.addr %s335, 128
        %s337 = scalar_lea.vmem [#allocation8], %s336
        // Predicated region
        $region49: #{tpu_custom_call.1} parent=39 // pred_check
          %p338 = pneg %p141
        $region50: #{tpu_custom_call.1} parent=39 // pred_check_branch
          %340 = sbr.rel (%p338) target = $region52
        $region51: #{tpu_custom_call.1} parent=39 // pred_region
          %341 = dma.done %s334, 2048
        $region52: #{tpu_custom_call.1} parent=39 // pred_fallthru
          _
        %s342 = sand.u32 %s50, 1
        %s343 = scalar_lea.sflag [#allocation4], %s342
        %s344 = sand.u32 %s50, 1
        %s345 = smul.addr %s344, 8
        %s346 = scalar_lea.vmem [#allocation3], %s345
        %p347 = pneg %p63
        %p348 = pneg %p60
        %s349 = sand.u32 %s30, 1
        %s350 = scalar_lea.sflag [#allocation7], %s349
        %s351 = sand.u32 %s76, 1
        %s352 = smul.addr %s351, 384
        %s353 = scalar_lea.vmem [#allocation6], %s352
        %p354 = pneg %p89
        %p355 = pneg %p86
        %s356 = smul.u32 3, %s35
        %p357 = scmp.lt.s32.totalorder %s356, 5
        %s358 = scalar_select %p357, %s356, 5
        %s359 = scalar_lea.vmem %s2, %s358
        %p360 = pneg %p115
        %p361 = pneg %p112
        %s362 = sand.u32 %s30, 1
        %s363 = scalar_lea.sflag [#allocation7], %s362
        %s364 = sand.u32 %s128, 1
        %s365 = smul.addr %s364, 128
        %s366 = scalar_lea.vmem [#allocation8], %s365
        %p367 = pneg %p141
        %p368 = pneg %p138
        %p369 = pneg %p162
        %p370 = pneg %p159
        %p371 = pneg %p188
        %p372 = pneg %p185
        %s373 = sand.u32 %s175, 1
        %s374 = scalar_lea.sflag [#allocation5], %s373
        %s375 = sand.u32 %s175, 1
        %s376 = smul.addr %s375, 16
        %s377 = scalar_lea.vmem [#allocation9], %s376
        %p378 = pneg %p216
        %p379 = pneg %p213
        %s380 = sand.u32 %s203, 1
        %s381 = scalar_lea.sflag [#allocation11], %s380
        %s382 = sand.u32 %s203, 1
        %s383 = smul.addr %s382, 8
        %s384 = scalar_lea.vmem [#allocation10], %s383
        %s385 = smul.u32 3, %s35
        %s386 = smul.u32 3, %s35
        %p387 = scmp.lt.s32.totalorder %s386, 5
        %s388 = scalar_select %p387, %s386, 5
        %s389 = scalar_lea.vmem %s2, %s388
        %s390 = smul.u32 3, %s35
        %s391 = smul.u32 2, %s35
        %s392 = smul.u32 2, %s35
        %v394 = vld [vmem:[%s319] sm:$0xff]
        %v395 = vld [vmem:[%s328] sm:$0xff]
        %v396 = vld [vmem:[%s328 + $0x8] sm:$0xf]
        %v397 = vld [vmem:[%s328 + $0xc] sm:$0xff]
        %v398 = vld [vmem:[%s328 + $0x14] sm:$0xf]
        %v399 = vld [vmem:[%s328 + $0x18] sm:$0xff]
        %v400 = vld [vmem:[%s328 + $0x20] sm:$0xf]
        %v401 = vld [vmem:[%s328 + $0x24] sm:$0xff]
        %v402 = vld [vmem:[%s328 + $0x2c] sm:$0xf]
        %v403 = vld [vmem:[%s328 + $0x30] sm:$0xff]
        %v404 = vld [vmem:[%s328 + $0x38] sm:$0xf]
        %v405 = vld [vmem:[%s328 + $0x3c] sm:$0xff]
        %v406 = vld [vmem:[%s328 + $0x44] sm:$0xf]
        %v407 = vld [vmem:[%s328 + $0x48] sm:$0xff]
        %v408 = vld [vmem:[%s328 + $0x50] sm:$0xf]
        %v409 = vld [vmem:[%s328 + $0x54] sm:$0xff]
        %v410 = vld [vmem:[%s328 + $0x5c] sm:$0xf]
        %v411 = vld [vmem:[%s328 + $0x60] sm:$0xff]
        %v412 = vld [vmem:[%s328 + $0x68] sm:$0xf]
        %v413 = vld [vmem:[%s328 + $0x6c] sm:$0xff]
        %v414 = vld [vmem:[%s328 + $0x74] sm:$0xf]
        %v415 = vld [vmem:[%s328 + $0x78] sm:$0xff]
        %v416 = vld [vmem:[%s328 + $0x80] sm:$0xf]
        %v417 = vld [vmem:[%s328 + $0x84] sm:$0xff]
        %v418 = vld [vmem:[%s328 + $0x8c] sm:$0xf]
        %v419 = vld [vmem:[%s328 + $0x90] sm:$0xff]
        %v420 = vld [vmem:[%s328 + $0x98] sm:$0xf]
        %v421 = vld [vmem:[%s328 + $0x9c] sm:$0xff]
        %v422 = vld [vmem:[%s328 + $0xa4] sm:$0xf]
        %v423 = vld [vmem:[%s328 + $0xa8] sm:$0xff]
        %v424 = vld [vmem:[%s328 + $0xb0] sm:$0xf]
        %v425 = vld [vmem:[%s328 + $0xb4] sm:$0xff]
        %v426 = vld [vmem:[%s328 + $0xbc] sm:$0xf]
        %v427 = vld [vmem:[%s328 + $0xc0] sm:$0xff]
        %v428 = vld [vmem:[%s328 + $0xc8] sm:$0xf]
        %v429 = vld [vmem:[%s328 + $0xcc] sm:$0xff]
        %v430 = vld [vmem:[%s328 + $0xd4] sm:$0xf]
        %v431 = vld [vmem:[%s328 + $0xd8] sm:$0xff]
        %v432 = vld [vmem:[%s328 + $0xe0] sm:$0xf]
        %v433 = vld [vmem:[%s328 + $0xe4] sm:$0xff]
        %v434 = vld [vmem:[%s328 + $0xec] sm:$0xf]
        %v435 = vld [vmem:[%s328 + $0xf0] sm:$0xff]
        %v436 = vld [vmem:[%s328 + $0xf8] sm:$0xf]
        %v437 = vld [vmem:[%s328 + $0xfc] sm:$0xff]
        %v438 = vld [vmem:[%s328 + $0x104] sm:$0xf]
        %v439 = vld [vmem:[%s328 + $0x108] sm:$0xff]
        %v440 = vld [vmem:[%s328 + $0x110] sm:$0xf]
        %v441 = vld [vmem:[%s328 + $0x114] sm:$0xff]
        %v442 = vld [vmem:[%s328 + $0x11c] sm:$0xf]
        %v443 = vld [vmem:[%s328 + $0x120] sm:$0xff]
        %v444 = vld [vmem:[%s328 + $0x128] sm:$0xf]
        %v445 = vld [vmem:[%s328 + $0x12c] sm:$0xff]
        %v446 = vld [vmem:[%s328 + $0x134] sm:$0xf]
        %v447 = vld [vmem:[%s328 + $0x138] sm:$0xff]
        %v448 = vld [vmem:[%s328 + $0x140] sm:$0xf]
        %v449 = vld [vmem:[%s328 + $0x144] sm:$0xff]
        %v450 = vld [vmem:[%s328 + $0x14c] sm:$0xf]
        %v451 = vld [vmem:[%s328 + $0x150] sm:$0xff]
        %v452 = vld [vmem:[%s328 + $0x158] sm:$0xf]
        %v453 = vld [vmem:[%s328 + $0x15c] sm:$0xff]
        %v454 = vld [vmem:[%s328 + $0x164] sm:$0xf]
        %v455 = vld [vmem:[%s328 + $0x168] sm:$0xff]
        %v456 = vld [vmem:[%s328 + $0x170] sm:$0xf]
        %v457 = vld [vmem:[%s328 + $0x174] sm:$0xff]
        %v458 = vld [vmem:[%s328 + $0x17c] sm:$0xf]
        %v459 = vld [vmem:[%s389] sm:$0x7]
        %v461 = vlaneseq
        %v462 = vshrl.u32 %v461, 7
        %v463 = vsub.s32 0, %v462
        %v464 = vrot.slane %v459, %v463
        %v465 = vlaneseq
        %v466 = vshrl.u32 %v465, 7
        %v467 = vsub.s32 1, %v466
        %v468 = vrot.slane %v459, %v467
        %v469 = vlaneseq
        %v470 = vshrl.u32 %v469, 7
        %v471 = vsub.s32 2, %v470
        %v472 = vrot.slane %v459, %v471
        %v477 = vunpack.c.l.b16 %v394
        %v478 = vunpack.c.h.b16 %v394
        %v479 = vpack.c.b16 %v477, %v477
        %v480 = vpack.c.b16 %v478, %v478
        %v547 = vunpack.c.l.b16 %v395
        %v548 = vunpack.c.h.b16 %v395
        %v549 = vunpack.c.l.b16 %v396
        %v550 = vunpack.c.l.b16 %v397
        %v551 = vunpack.c.h.b16 %v397
        %v552 = vunpack.c.l.b16 %v398
        %v553 = vunpack.c.l.b16 %v399
        %v554 = vunpack.c.h.b16 %v399
        %v555 = vunpack.c.l.b16 %v400
        %v556 = vunpack.c.l.b16 %v401
        %v557 = vunpack.c.h.b16 %v401
        %v558 = vunpack.c.l.b16 %v402
        %v559 = vunpack.c.l.b16 %v403
        %v560 = vunpack.c.h.b16 %v403
        %v561 = vunpack.c.l.b16 %v404
        %v562 = vunpack.c.l.b16 %v405
        %v563 = vunpack.c.h.b16 %v405
        %v564 = vunpack.c.l.b16 %v406
        %v565 = vunpack.c.l.b16 %v407
        %v566 = vunpack.c.h.b16 %v407
        %v567 = vunpack.c.l.b16 %v408
        %v568 = vunpack.c.l.b16 %v409
        %v569 = vunpack.c.h.b16 %v409
        %v570 = vunpack.c.l.b16 %v410
        %v571 = vunpack.c.l.b16 %v411
        %v572 = vunpack.c.h.b16 %v411
        %v573 = vunpack.c.l.b16 %v412
        %v574 = vunpack.c.l.b16 %v413
        %v575 = vunpack.c.h.b16 %v413
        %v576 = vunpack.c.l.b16 %v414
        %v577 = vunpack.c.l.b16 %v415
        %v578 = vunpack.c.h.b16 %v415
        %v579 = vunpack.c.l.b16 %v416
        %v580 = vunpack.c.l.b16 %v417
        %v581 = vunpack.c.h.b16 %v417
        %v582 = vunpack.c.l.b16 %v418
        %v583 = vunpack.c.l.b16 %v419
        %v584 = vunpack.c.h.b16 %v419
        %v585 = vunpack.c.l.b16 %v420
        %v586 = vunpack.c.l.b16 %v421
        %v587 = vunpack.c.h.b16 %v421
        %v588 = vunpack.c.l.b16 %v422
        %v589 = vunpack.c.l.b16 %v423
        %v590 = vunpack.c.h.b16 %v423
        %v591 = vunpack.c.l.b16 %v424
        %v592 = vunpack.c.l.b16 %v425
        %v593 = vunpack.c.h.b16 %v425
        %v594 = vunpack.c.l.b16 %v426
        %v595 = vunpack.c.l.b16 %v427
        %v596 = vunpack.c.h.b16 %v427
        %v597 = vunpack.c.l.b16 %v428
        %v598 = vunpack.c.l.b16 %v429
        %v599 = vunpack.c.h.b16 %v429
        %v600 = vunpack.c.l.b16 %v430
        %v601 = vunpack.c.l.b16 %v431
        %v602 = vunpack.c.h.b16 %v431
        %v603 = vunpack.c.l.b16 %v432
        %v604 = vunpack.c.l.b16 %v433
        %v605 = vunpack.c.h.b16 %v433
        %v606 = vunpack.c.l.b16 %v434
        %v607 = vunpack.c.l.b16 %v435
        %v608 = vunpack.c.h.b16 %v435
        %v609 = vunpack.c.l.b16 %v436
        %v610 = vunpack.c.l.b16 %v437
        %v611 = vunpack.c.h.b16 %v437
        %v612 = vunpack.c.l.b16 %v438
        %v613 = vunpack.c.l.b16 %v439
        %v614 = vunpack.c.h.b16 %v439
        %v615 = vunpack.c.l.b16 %v440
        %v616 = vunpack.c.l.b16 %v441
        %v617 = vunpack.c.h.b16 %v441
        %v618 = vunpack.c.l.b16 %v442
        %v619 = vunpack.c.l.b16 %v443
        %v620 = vunpack.c.h.b16 %v443
        %v621 = vunpack.c.l.b16 %v444
        %v622 = vunpack.c.l.b16 %v445
        %v623 = vunpack.c.h.b16 %v445
        %v624 = vunpack.c.l.b16 %v446
        %v625 = vunpack.c.l.b16 %v447
        %v626 = vunpack.c.h.b16 %v447
        %v627 = vunpack.c.l.b16 %v448
        %v628 = vunpack.c.l.b16 %v449
        %v629 = vunpack.c.h.b16 %v449
        %v630 = vunpack.c.l.b16 %v450
        %v631 = vunpack.c.l.b16 %v451
        %v632 = vunpack.c.h.b16 %v451
        %v633 = vunpack.c.l.b16 %v452
        %v634 = vunpack.c.l.b16 %v453
        %v635 = vunpack.c.h.b16 %v453
        %v636 = vunpack.c.l.b16 %v454
        %v637 = vunpack.c.l.b16 %v455
        %v638 = vunpack.c.h.b16 %v455
        %v639 = vunpack.c.l.b16 %v456
        %v640 = vunpack.c.l.b16 %v457
        %v641 = vunpack.c.h.b16 %v457
        %v642 = vunpack.c.l.b16 %v458
        %v643 = vpack.c.b16 %v550, %v547
        %v644 = vpack.c.b16 %v551, %v548
        %v645 = vpack.c.b16 %v552, %v549
        %v646 = vpack.c.b16 %v556, %v553
        %v647 = vpack.c.b16 %v557, %v554
        %v648 = vpack.c.b16 %v558, %v555
        %v649 = vpack.c.b16 %v562, %v559
        %v650 = vpack.c.b16 %v563, %v560
        %v651 = vpack.c.b16 %v564, %v561
        %v652 = vpack.c.b16 %v568, %v565
        %v653 = vpack.c.b16 %v569, %v566
        %v654 = vpack.c.b16 %v570, %v567
        %v655 = vpack.c.b16 %v574, %v571
        %v656 = vpack.c.b16 %v575, %v572
        %v657 = vpack.c.b16 %v576, %v573
        %v658 = vpack.c.b16 %v580, %v577
        %v659 = vpack.c.b16 %v581, %v578
        %v660 = vpack.c.b16 %v582, %v579
        %v661 = vpack.c.b16 %v586, %v583
        %v662 = vpack.c.b16 %v587, %v584
        %v663 = vpack.c.b16 %v588, %v585
        %v664 = vpack.c.b16 %v592, %v589
        %v665 = vpack.c.b16 %v593, %v590
        %v666 = vpack.c.b16 %v594, %v591
        %v667 = vpack.c.b16 %v598, %v595
        %v668 = vpack.c.b16 %v599, %v596
        %v669 = vpack.c.b16 %v600, %v597
        %v670 = vpack.c.b16 %v604, %v601
        %v671 = vpack.c.b16 %v605, %v602
        %v672 = vpack.c.b16 %v606, %v603
        %v673 = vpack.c.b16 %v610, %v607
        %v674 = vpack.c.b16 %v611, %v608
        %v675 = vpack.c.b16 %v612, %v609
        %v676 = vpack.c.b16 %v616, %v613
        %v677 = vpack.c.b16 %v617, %v614
        %v678 = vpack.c.b16 %v618, %v615
        %v679 = vpack.c.b16 %v622, %v619
        %v680 = vpack.c.b16 %v623, %v620
        %v681 = vpack.c.b16 %v624, %v621
        %v682 = vpack.c.b16 %v628, %v625
        %v683 = vpack.c.b16 %v629, %v626
        %v684 = vpack.c.b16 %v630, %v627
        %v685 = vpack.c.b16 %v634, %v631
        %v686 = vpack.c.b16 %v635, %v632
        %v687 = vpack.c.b16 %v636, %v633
        %v688 = vpack.c.b16 %v640, %v637
        %v689 = vpack.c.b16 %v641, %v638
        %v690 = vpack.c.b16 %v642, %v639
        %739 = vmatprep.subr.bf16.mxu0 %v644
        %740 = vmatpush1.bf16.msra.mxu0 %v643
        %741 = vmatprep.subr.bf16.mxu0 %v647
        %742 = vmatpush1.bf16.msra.mxu0 %v646
        %743 = vmatprep.subr.bf16.mxu0 %v650
        %744 = vmatpush1.bf16.msra.mxu0 %v649
        %745 = vmatprep.subr.bf16.mxu0 %v653
        %746 = vmatpush1.bf16.msra.mxu0 %v652
        %747 = vmatprep.subr.bf16.mxu0 %v656
        %748 = vmatpush1.bf16.msra.mxu0 %v655
        %749 = vmatprep.subr.bf16.mxu0 %v659
        %750 = vmatpush1.bf16.msra.mxu0 %v658
        %751 = vmatprep.subr.bf16.mxu0 %v662
        %752 = vmatpush1.bf16.msra.mxu0 %v661
        %753 = vmatprep.subr.bf16.mxu0 %v665
        %754 = vmatpush1.bf16.msra.mxu0 %v664
        %755 = vmatprep.subr.bf16.mxu0 %v668
        %756 = vmatpush1.bf16.msra.mxu0 %v667
        %757 = vmatprep.subr.bf16.mxu0 %v671
        %758 = vmatpush1.bf16.msra.mxu0 %v670
        %759 = vmatprep.subr.bf16.mxu0 %v674
        %760 = vmatpush1.bf16.msra.mxu0 %v673
        %761 = vmatprep.subr.bf16.mxu0 %v677
        %762 = vmatpush1.bf16.msra.mxu0 %v676
        %763 = vmatprep.subr.bf16.mxu0 %v680
        %764 = vmatpush1.bf16.msra.mxu0 %v679
        %765 = vmatprep.subr.bf16.mxu0 %v683
        %766 = vmatpush1.bf16.msra.mxu0 %v682
        %767 = vmatprep.subr.bf16.mxu0 %v686
        %768 = vmatpush1.bf16.msra.mxu0 %v685
        %769 = vmatprep.subr.bf16.mxu0 %v689
        %770 = vmatpush1.bf16.msra.mxu0 %v688
        %771 = vmatprep.mubr.bf16.mxu0 %v480
        %772 = vmatmul.mubr.bf16.gmra.mrb[0].mxu0 %v479
        %v773 = vpop.f32.mrb[0].mxu0
        %v774 = vadd.f32 %v464, %v773
        %v775 = vpop.f32.mrb[0].mxu0
        %v776 = vadd.f32 %v468, %v775
        %v777 = vpop.f32.mrb[0].mxu0
        %v778 = vpop.f32.mrb[0].mxu0
        %779 = vdwg.mxu0
        %780 = vmatprep.subr.bf16.mxu0 0
        %781 = vmatpush1.bf16.msra.mxu0 %v645
        %782 = vmatprep.subr.bf16.mxu0 0
        %783 = vmatpush1.bf16.msra.mxu0 %v648
        %784 = vmatprep.subr.bf16.mxu0 0
        %785 = vmatpush1.bf16.msra.mxu0 %v651
        %786 = vmatprep.subr.bf16.mxu0 0
        %787 = vmatpush1.bf16.msra.mxu0 %v654
        %788 = vmatprep.subr.bf16.mxu0 0
        %789 = vmatpush1.bf16.msra.mxu0 %v657
        %790 = vmatprep.subr.bf16.mxu0 0
        %791 = vmatpush1.bf16.msra.mxu0 %v660
        %792 = vmatprep.subr.bf16.mxu0 0
        %793 = vmatpush1.bf16.msra.mxu0 %v663
        %794 = vmatprep.subr.bf16.mxu0 0
        %795 = vmatpush1.bf16.msra.mxu0 %v666
        %796 = vmatprep.subr.bf16.mxu0 0
        %797 = vmatpush1.bf16.msra.mxu0 %v669
        %798 = vmatprep.subr.bf16.mxu0 0
        %799 = vmatpush1.bf16.msra.mxu0 %v672
        %800 = vmatprep.subr.bf16.mxu0 0
        %801 = vmatpush1.bf16.msra.mxu0 %v675
        %802 = vmatprep.subr.bf16.mxu0 0
        %803 = vmatpush1.bf16.msra.mxu0 %v678
        %804 = vmatprep.subr.bf16.mxu0 0
        %805 = vmatpush1.bf16.msra.mxu0 %v681
        %806 = vmatprep.subr.bf16.mxu0 0
        %807 = vmatpush1.bf16.msra.mxu0 %v684
        %808 = vmatprep.subr.bf16.mxu0 0
        %809 = vmatpush1.bf16.msra.mxu0 %v687
        %810 = vmatprep.subr.bf16.mxu0 0
        %811 = vmatpush1.bf16.msra.mxu0 %v690
        %812 = vmatprep.mubr.bf16.mxu0 %v480
        %813 = vmatmul.mubr.bf16.gmra.mrb[0].mxu0 %v479
        %v814 = vpop.f32.mrb[0].mxu0
        %v815 = vadd.f32 %v472, %v814
        %v816 = vpop.f32.mrb[0].mxu0
        %v817 = vpop.f32.mrb[0].mxu0
        %v818 = vpop.f32.mrb[0].mxu0
        %819 = vdwg.mxu0
        %v820 = vpack.c.bf16 %v774, %v774
        %v821 = vpack.c.bf16 %v776, %v776
        %v822 = vpack.c.bf16 %v815, %v815
        %824 = vrot.lane.b32.xlu0 %v820, 64
        %v825 = vpop.permute.xlu0 %824
        %v827 = vunpack.c.l.s4 1983009808
        %v828 = vunpack.c.0.s8 %v827
        %v829 = vlaneseq
        %v830 = vshrl.u32 %v829, 7
        %v831 = vsub.s32 %v828, %v830
        %v832 = vrot.slane %v820, %v831
        %v833 = vcombine.high %v832, 0
        %v835 = vunpack.c.l.s4 1934713408
        %v836 = vunpack.c.0.s8 %v835
        %v837 = vlaneseq
        %v838 = vshrl.u32 %v837, 7
        %v839 = vsub.s32 %v836, %v838
        %v840 = vrot.slane %v832, %v839
        %v842 = vunpack.c.l.s4 1934713408
        %v843 = vunpack.c.0.s8 %v842
        %v844 = vlaneseq
        %v845 = vshrl.u32 %v844, 7
        %v846 = vsub.s32 %v843, %v845
        %v847 = vrot.slane %v833, %v846
        %v848 = vcombine.high %v840, 0
        %v849 = vcombine.high %v847, 0
        %v852 = vunpack.c.l.s4 1983009808
        %v853 = vunpack.c.0.s8 %v852
        %v854 = vlaneseq
        %v855 = vshrl.u32 %v854, 7
        %v856 = vsub.s32 %v853, %v855
        %v857 = vrot.slane %v825, %v856
        %v858 = vcombine.high %v857, 0
        %v860 = vunpack.c.l.s4 1934713408
        %v861 = vunpack.c.0.s8 %v860
        %v862 = vlaneseq
        %v863 = vshrl.u32 %v862, 7
        %v864 = vsub.s32 %v861, %v863
        %v865 = vrot.slane %v857, %v864
        %v867 = vunpack.c.l.s4 1934713408
        %v868 = vunpack.c.0.s8 %v867
        %v869 = vlaneseq
        %v870 = vshrl.u32 %v869, 7
        %v871 = vsub.s32 %v868, %v870
        %v872 = vrot.slane %v858, %v871
        %v873 = vcombine.high %v865, 0
        %v874 = vcombine.high %v872, 0
        %v877 = vpack.i.b16 %v865, %v840
        %v879 = vshrl.u32 %v840, 16
        %v880 = vshrl.u32 %v865, 16
        %v881 = vpack.i.b16 %v880, %v879
        %v885 = vpack.i.b16 %v873, %v848
        %v887 = vshrl.u32 %v848, 16
        %v888 = vshrl.u32 %v873, 16
        %v889 = vpack.i.b16 %v888, %v887
        %v893 = vpack.i.b16 %v872, %v847
        %v895 = vshrl.u32 %v847, 16
        %v896 = vshrl.u32 %v872, 16
        %v897 = vpack.i.b16 %v896, %v895
        %v901 = vpack.i.b16 %v874, %v849
        %v903 = vshrl.u32 %v849, 16
        %v904 = vshrl.u32 %v874, 16
        %v905 = vpack.i.b16 %v904, %v903
        %v907 = vcombine.low %v877, %v893
        %v909 = vunpack.c.l.s4 1983009808
        %v910 = vunpack.c.0.s8 %v909
        %v911 = vlaneseq
        %v912 = vshrl.u32 %v911, 7
        %v913 = vsub.s32 %v910, %v912
        %v914 = vrot.slane %v907, %v913
        %v915 = vcombine.low %v885, %v901
        %v917 = vunpack.c.l.s4 1983009808
        %v918 = vunpack.c.0.s8 %v917
        %v919 = vlaneseq
        %v920 = vshrl.u32 %v919, 7
        %v921 = vsub.s32 %v918, %v920
        %v922 = vrot.slane %v915, %v921
        %v923 = vcombine.low %v914, %v922
        %v925 = vunpack.c.l.s4 1934713408
        %v926 = vunpack.c.0.s8 %v925
        %v927 = vlaneseq
        %v928 = vshrl.u32 %v927, 7
        %v929 = vsub.s32 %v926, %v928
        %v930 = vrot.slane %v923, %v929
        %v931 = vcombine.low %v881, %v897
        %v933 = vunpack.c.l.s4 1983009808
        %v934 = vunpack.c.0.s8 %v933
        %v935 = vlaneseq
        %v936 = vshrl.u32 %v935, 7
        %v937 = vsub.s32 %v934, %v936
        %v938 = vrot.slane %v931, %v937
        %v939 = vcombine.low %v889, %v905
        %v941 = vunpack.c.l.s4 1983009808
        %v942 = vunpack.c.0.s8 %v941
        %v943 = vlaneseq
        %v944 = vshrl.u32 %v943, 7
        %v945 = vsub.s32 %v942, %v944
        %v946 = vrot.slane %v939, %v945
        %v947 = vcombine.low %v938, %v946
        %v949 = vunpack.c.l.s4 1934713408
        %v950 = vunpack.c.0.s8 %v949
        %v951 = vlaneseq
        %v952 = vshrl.u32 %v951, 7
        %v953 = vsub.s32 %v950, %v952
        %v954 = vrot.slane %v947, %v953
        %v957 = vpack.i.b16 %v954, %v930
        %v958 = vshrl.u32 %v930, 16
        %v959 = vshrl.u32 %v954, 16
        %v960 = vpack.i.b16 %v959, %v958
        %962 = vrot.lane.b32.xlu0 %v821, 64
        %v963 = vpop.permute.xlu0 %962
        %v965 = vunpack.c.l.s4 1983009808
        %v966 = vunpack.c.0.s8 %v965
        %v967 = vlaneseq
        %v968 = vshrl.u32 %v967, 7
        %v969 = vsub.s32 %v966, %v968
        %v970 = vrot.slane %v821, %v969
        %v971 = vcombine.high %v970, 0
        %v973 = vunpack.c.l.s4 1934713408
        %v974 = vunpack.c.0.s8 %v973
        %v975 = vlaneseq
        %v976 = vshrl.u32 %v975, 7
        %v977 = vsub.s32 %v974, %v976
        %v978 = vrot.slane %v970, %v977
        %v980 = vunpack.c.l.s4 1934713408
        %v981 = vunpack.c.0.s8 %v980
        %v982 = vlaneseq
        %v983 = vshrl.u32 %v982, 7
        %v984 = vsub.s32 %v981, %v983
        %v985 = vrot.slane %v971, %v984
        %v986 = vcombine.high %v978, 0
        %v987 = vcombine.high %v985, 0
        %v990 = vunpack.c.l.s4 1983009808
        %v991 = vunpack.c.0.s8 %v990
        %v992 = vlaneseq
        %v993 = vshrl.u32 %v992, 7
        %v994 = vsub.s32 %v991, %v993
        %v995 = vrot.slane %v963, %v994
        %v996 = vcombine.high %v995, 0
        %v998 = vunpack.c.l.s4 1934713408
        %v999 = vunpack.c.0.s8 %v998
        %v1000 = vlaneseq
        %v1001 = vshrl.u32 %v1000, 7
        %v1002 = vsub.s32 %v999, %v1001
        %v1003 = vrot.slane %v995, %v1002
        %v1005 = vunpack.c.l.s4 1934713408
        %v1006 = vunpack.c.0.s8 %v1005
        %v1007 = vlaneseq
        %v1008 = vshrl.u32 %v1007, 7
        %v1009 = vsub.s32 %v1006, %v1008
        %v1010 = vrot.slane %v996, %v1009
        %v1011 = vcombine.high %v1003, 0
        %v1012 = vcombine.high %v1010, 0
        %v1015 = vpack.i.b16 %v1003, %v978
        %v1017 = vshrl.u32 %v978, 16
        %v1018 = vshrl.u32 %v1003, 16
        %v1019 = vpack.i.b16 %v1018, %v1017
        %v1023 = vpack.i.b16 %v1011, %v986
        %v1025 = vshrl.u32 %v986, 16
        %v1026 = vshrl.u32 %v1011, 16
        %v1027 = vpack.i.b16 %v1026, %v1025
        %v1031 = vpack.i.b16 %v1010, %v985
        %v1033 = vshrl.u32 %v985, 16
        %v1034 = vshrl.u32 %v1010, 16
        %v1035 = vpack.i.b16 %v1034, %v1033
        %v1039 = vpack.i.b16 %v1012, %v987
        %v1041 = vshrl.u32 %v987, 16
        %v1042 = vshrl.u32 %v1012, 16
        %v1043 = vpack.i.b16 %v1042, %v1041
        %v1045 = vcombine.low %v1015, %v1031
        %v1047 = vunpack.c.l.s4 1983009808
        %v1048 = vunpack.c.0.s8 %v1047
        %v1049 = vlaneseq
        %v1050 = vshrl.u32 %v1049, 7
        %v1051 = vsub.s32 %v1048, %v1050
        %v1052 = vrot.slane %v1045, %v1051
        %v1053 = vcombine.low %v1023, %v1039
        %v1055 = vunpack.c.l.s4 1983009808
        %v1056 = vunpack.c.0.s8 %v1055
        %v1057 = vlaneseq
        %v1058 = vshrl.u32 %v1057, 7
        %v1059 = vsub.s32 %v1056, %v1058
        %v1060 = vrot.slane %v1053, %v1059
        %v1061 = vcombine.low %v1052, %v1060
        %v1063 = vunpack.c.l.s4 1934713408
        %v1064 = vunpack.c.0.s8 %v1063
        %v1065 = vlaneseq
        %v1066 = vshrl.u32 %v1065, 7
        %v1067 = vsub.s32 %v1064, %v1066
        %v1068 = vrot.slane %v1061, %v1067
        %v1069 = vcombine.low %v1019, %v1035
        %v1071 = vunpack.c.l.s4 1983009808
        %v1072 = vunpack.c.0.s8 %v1071
        %v1073 = vlaneseq
        %v1074 = vshrl.u32 %v1073, 7
        %v1075 = vsub.s32 %v1072, %v1074
        %v1076 = vrot.slane %v1069, %v1075
        %v1077 = vcombine.low %v1027, %v1043
        %v1079 = vunpack.c.l.s4 1983009808
        %v1080 = vunpack.c.0.s8 %v1079
        %v1081 = vlaneseq
        %v1082 = vshrl.u32 %v1081, 7
        %v1083 = vsub.s32 %v1080, %v1082
        %v1084 = vrot.slane %v1077, %v1083
        %v1085 = vcombine.low %v1076, %v1084
        %v1087 = vunpack.c.l.s4 1934713408
        %v1088 = vunpack.c.0.s8 %v1087
        %v1089 = vlaneseq
        %v1090 = vshrl.u32 %v1089, 7
        %v1091 = vsub.s32 %v1088, %v1090
        %v1092 = vrot.slane %v1085, %v1091
        %v1095 = vpack.i.b16 %v1092, %v1068
        %v1096 = vshrl.u32 %v1068, 16
        %v1097 = vshrl.u32 %v1092, 16
        %v1098 = vpack.i.b16 %v1097, %v1096
        %1100 = vrot.lane.b32.xlu0 %v822, 64
        %v1101 = vpop.permute.xlu0 %1100
        %v1103 = vunpack.c.l.s4 1983009808
        %v1104 = vunpack.c.0.s8 %v1103
        %v1105 = vlaneseq
        %v1106 = vshrl.u32 %v1105, 7
        %v1107 = vsub.s32 %v1104, %v1106
        %v1108 = vrot.slane %v822, %v1107
        %v1109 = vcombine.high %v1108, 0
        %v1111 = vunpack.c.l.s4 1934713408
        %v1112 = vunpack.c.0.s8 %v1111
        %v1113 = vlaneseq
        %v1114 = vshrl.u32 %v1113, 7
        %v1115 = vsub.s32 %v1112, %v1114
        %v1116 = vrot.slane %v1108, %v1115
        %v1118 = vunpack.c.l.s4 1934713408
        %v1119 = vunpack.c.0.s8 %v1118
        %v1120 = vlaneseq
        %v1121 = vshrl.u32 %v1120, 7
        %v1122 = vsub.s32 %v1119, %v1121
        %v1123 = vrot.slane %v1109, %v1122
        %v1124 = vcombine.high %v1116, 0
        %v1125 = vcombine.high %v1123, 0
        %v1128 = vunpack.c.l.s4 1983009808
        %v1129 = vunpack.c.0.s8 %v1128
        %v1130 = vlaneseq
        %v1131 = vshrl.u32 %v1130, 7
        %v1132 = vsub.s32 %v1129, %v1131
        %v1133 = vrot.slane %v1101, %v1132
        %v1134 = vcombine.high %v1133, 0
        %v1136 = vunpack.c.l.s4 1934713408
        %v1137 = vunpack.c.0.s8 %v1136
        %v1138 = vlaneseq
        %v1139 = vshrl.u32 %v1138, 7
        %v1140 = vsub.s32 %v1137, %v1139
        %v1141 = vrot.slane %v1133, %v1140
        %v1143 = vunpack.c.l.s4 1934713408
        %v1144 = vunpack.c.0.s8 %v1143
        %v1145 = vlaneseq
        %v1146 = vshrl.u32 %v1145, 7
        %v1147 = vsub.s32 %v1144, %v1146
        %v1148 = vrot.slane %v1134, %v1147
        %v1149 = vcombine.high %v1141, 0
        %v1150 = vcombine.high %v1148, 0
        %v1153 = vpack.i.b16 %v1141, %v1116
        %v1155 = vshrl.u32 %v1116, 16
        %v1156 = vshrl.u32 %v1141, 16
        %v1157 = vpack.i.b16 %v1156, %v1155
        %v1161 = vpack.i.b16 %v1149, %v1124
        %v1163 = vshrl.u32 %v1124, 16
        %v1164 = vshrl.u32 %v1149, 16
        %v1165 = vpack.i.b16 %v1164, %v1163
        %v1169 = vpack.i.b16 %v1148, %v1123
        %v1171 = vshrl.u32 %v1123, 16
        %v1172 = vshrl.u32 %v1148, 16
        %v1173 = vpack.i.b16 %v1172, %v1171
        %v1177 = vpack.i.b16 %v1150, %v1125
        %v1179 = vshrl.u32 %v1125, 16
        %v1180 = vshrl.u32 %v1150, 16
        %v1181 = vpack.i.b16 %v1180, %v1179
        %v1183 = vcombine.low %v1153, %v1169
        %v1185 = vunpack.c.l.s4 1983009808
        %v1186 = vunpack.c.0.s8 %v1185
        %v1187 = vlaneseq
        %v1188 = vshrl.u32 %v1187, 7
        %v1189 = vsub.s32 %v1186, %v1188
        %v1190 = vrot.slane %v1183, %v1189
        %v1191 = vcombine.low %v1161, %v1177
        %v1193 = vunpack.c.l.s4 1983009808
        %v1194 = vunpack.c.0.s8 %v1193
        %v1195 = vlaneseq
        %v1196 = vshrl.u32 %v1195, 7
        %v1197 = vsub.s32 %v1194, %v1196
        %v1198 = vrot.slane %v1191, %v1197
        %v1199 = vcombine.low %v1190, %v1198
        %v1201 = vunpack.c.l.s4 1934713408
        %v1202 = vunpack.c.0.s8 %v1201
        %v1203 = vlaneseq
        %v1204 = vshrl.u32 %v1203, 7
        %v1205 = vsub.s32 %v1202, %v1204
        %v1206 = vrot.slane %v1199, %v1205
        %v1207 = vcombine.low %v1157, %v1173
        %v1209 = vunpack.c.l.s4 1983009808
        %v1210 = vunpack.c.0.s8 %v1209
        %v1211 = vlaneseq
        %v1212 = vshrl.u32 %v1211, 7
        %v1213 = vsub.s32 %v1210, %v1212
        %v1214 = vrot.slane %v1207, %v1213
        %v1215 = vcombine.low %v1165, %v1181
        %v1217 = vunpack.c.l.s4 1983009808
        %v1218 = vunpack.c.0.s8 %v1217
        %v1219 = vlaneseq
        %v1220 = vshrl.u32 %v1219, 7
        %v1221 = vsub.s32 %v1218, %v1220
        %v1222 = vrot.slane %v1215, %v1221
        %v1223 = vcombine.low %v1214, %v1222
        %v1225 = vunpack.c.l.s4 1934713408
        %v1226 = vunpack.c.0.s8 %v1225
        %v1227 = vlaneseq
        %v1228 = vshrl.u32 %v1227, 7
        %v1229 = vsub.s32 %v1226, %v1228
        %v1230 = vrot.slane %v1223, %v1229
        %v1233 = vpack.i.b16 %v1230, %v1206
        %v1234 = vshrl.u32 %v1206, 16
        %v1235 = vshrl.u32 %v1230, 16
        %v1236 = vpack.i.b16 %v1235, %v1234
        %vm1237 = vcmask 523264
        %v1239 = vsel %vm1237, %v957, 0
        %v1242 = vsel %vm1237, %v1095, 0
        %1244 = vmatprep.subr.bf16.mxu0 0
        %1245 = vmatpush1.bf16.xpose.msra.mxu0 %v1242
        %1246 = vmatprep.subr.bf16.mxu0 0
        %1247 = vmatpush1.bf16.xpose.msra.mxu0 0
        %1248 = vmatprep.subr.bf16.mxu0 0
        %1249 = vmatpush1.bf16.xpose.msra.mxu0 0
        %1250 = vmatprep.subr.bf16.mxu0 0
        %1251 = vmatpush1.bf16.xpose.msra.mxu0 0
        %1252 = vmatprep.subr.bf16.mxu0 0
        %1253 = vmatpush1.bf16.xpose.msra.mxu0 0
        %1254 = vmatprep.subr.bf16.mxu0 0
        %1255 = vmatpush1.bf16.xpose.msra.mxu0 0
        %1256 = vmatprep.subr.bf16.mxu0 0
        %1257 = vmatpush1.bf16.xpose.msra.mxu0 0
        %1258 = vmatprep.subr.bf16.mxu0 0
        %1259 = vmatpush1.bf16.xpose.msra.mxu0 0
        %1260 = vmatprep.subr.bf16.mxu0 0
        %1261 = vmatpush1.bf16.xpose.msra.mxu0 0
        %1262 = vmatprep.subr.bf16.mxu0 0
        %1263 = vmatpush1.bf16.xpose.msra.mxu0 0
        %1264 = vmatprep.subr.bf16.mxu0 0
        %1265 = vmatpush1.bf16.xpose.msra.mxu0 0
        %1266 = vmatprep.subr.bf16.mxu0 0
        %1267 = vmatpush1.bf16.xpose.msra.mxu0 0
        %1268 = vmatprep.subr.bf16.mxu0 0
        %1269 = vmatpush1.bf16.xpose.msra.mxu0 0
        %1270 = vmatprep.subr.bf16.mxu0 0
        %1271 = vmatpush1.bf16.xpose.msra.mxu0 0
        %1272 = vmatprep.subr.bf16.mxu0 0
        %1273 = vmatpush1.bf16.xpose.msra.mxu0 0
        %1274 = vmatprep.subr.bf16.mxu0 0
        %1275 = vmatpush1.bf16.xpose.msra.mxu0 0
        %1276 = vmatprep.mubr.bf16.mxu0 0
        %1277 = vmatmul.mubr.bf16.gmra.mrb[0].mxu0 %v1239
        %v1278 = vpop.f32.mrb[0].mxu0
        %v1279 = vadd.f32 0.0, %v1278
        %v1280 = vpop.f32.mrb[0].mxu0
        %v1281 = vpop.f32.mrb[0].mxu0
        %v1282 = vpop.f32.mrb[0].mxu0
        %1283 = vdwg.mxu0
        %v1285 = vsel %vm1237, %v960, 0
        %v1288 = vsel %vm1237, %v1098, 0
        %1290 = vmatprep.subr.bf16.mxu0 0
        %1291 = vmatpush1.bf16.xpose.msra.mxu0 %v1288
        %1292 = vmatprep.subr.bf16.mxu0 0
        %1293 = vmatpush1.bf16.xpose.msra.mxu0 0
        %1294 = vmatprep.subr.bf16.mxu0 0
        %1295 = vmatpush1.bf16.xpose.msra.mxu0 0
        %1296 = vmatprep.subr.bf16.mxu0 0
        %1297 = vmatpush1.bf16.xpose.msra.mxu0 0
        %1298 = vmatprep.subr.bf16.mxu0 0
        %1299 = vmatpush1.bf16.xpose.msra.mxu0 0
        %1300 = vmatprep.subr.bf16.mxu0 0
        %1301 = vmatpush1.bf16.xpose.msra.mxu0 0
        %1302 = vmatprep.subr.bf16.mxu0 0
        %1303 = vmatpush1.bf16.xpose.msra.mxu0 0
        %1304 = vmatprep.subr.bf16.mxu0 0
        %1305 = vmatpush1.bf16.xpose.msra.mxu0 0
        %1306 = vmatprep.subr.bf16.mxu0 0
        %1307 = vmatpush1.bf16.xpose.msra.mxu0 0
        %1308 = vmatprep.subr.bf16.mxu0 0
        %1309 = vmatpush1.bf16.xpose.msra.mxu0 0
        %1310 = vmatprep.subr.bf16.mxu0 0
        %1311 = vmatpush1.bf16.xpose.msra.mxu0 0
        %1312 = vmatprep.subr.bf16.mxu0 0
        %1313 = vmatpush1.bf16.xpose.msra.mxu0 0
        %1314 = vmatprep.subr.bf16.mxu0 0
        %1315 = vmatpush1.bf16.xpose.msra.mxu0 0
        %1316 = vmatprep.subr.bf16.mxu0 0
        %1317 = vmatpush1.bf16.xpose.msra.mxu0 0
        %1318 = vmatprep.subr.bf16.mxu0 0
        %1319 = vmatpush1.bf16.xpose.msra.mxu0 0
        %1320 = vmatprep.subr.bf16.mxu0 0
        %1321 = vmatpush1.bf16.xpose.msra.mxu0 0
        %1322 = vmatprep.mubr.bf16.mxu0 0
        %1323 = vmatmul.mubr.bf16.gmra.mrb[0].mxu0 %v1285
        %v1324 = vpop.f32.mrb[0].mxu0
        %v1325 = vadd.f32 0.0, %v1324
        %v1326 = vpop.f32.mrb[0].mxu0
        %v1327 = vpop.f32.mrb[0].mxu0
        %v1328 = vpop.f32.mrb[0].mxu0
        %1329 = vdwg.mxu0
        %vm1330 = vcmask 64512
        %v1331 = vsel %vm1330, %v1279, -inf
        %1332 = vmax.xlane.f32.xlu0 %v1331
        %v1333 = vpop.xlane.xlu0 %1332
        %v1334 = vsel %vm1330, %v1325, -inf
        %1335 = vmax.xlane.f32.xlu0 %v1334
        %v1336 = vpop.xlane.xlu0 %1335
        %v1337 = vsub.f32 %v1279, %v1333
        %v1338 = vsub.f32 %v1325, %v1336
        %v1339 = vmul.f32 %v1337, 1.442695
        %v1340 = vpow.pop %v1339
        %v1341 = vmul.f32 %v1338, 1.442695
        %v1342 = vpow.pop %v1341
        %v1343 = vsel %vm1330, %v1340, 0.0
        %1344 = vadd.xlane.f32.xlu0 %v1343
        %v1345 = vpop.xlane.xlu0 %1344
        %v1346 = vsel %vm1330, %v1342, 0.0
        %1347 = vadd.xlane.f32.xlu0 %v1346
        %v1348 = vpop.xlane.xlu0 %1347
        %v1349 = vrcp.pop %v1345
        %v1350 = vrcp.pop %v1348
        %v1351 = vmul.f32 %v1340, %v1349
        %v1352 = vmul.f32 %v1342, %v1350
        %v1353 = vpack.c.bf16 %v1351, %v1351
        %v1354 = vpack.c.bf16 %v1352, %v1352
        %vm1355 = vcmask 60416
        %1356 = vst.msk [vmem:[%s384] sm:$0xf] %vm1355, %v1353
        %1357 = vst.msk [vmem:[%s384 + $0x4] sm:$0xf] %vm1355, %v1354
        %v1359 = vsel %vm1330, %v1353, 0
        %vm1361 = vcmask 1043456
        %v1363 = vsel %vm1361, %v1233, 0
        %1365 = vmatprep.subr.bf16.mxu0 0
        %1366 = vmatpush1.bf16.msra.mxu0 %v1363
        %1367 = vmatprep.subr.bf16.mxu0 0
        %1368 = vmatpush1.bf16.msra.mxu0 0
        %1369 = vmatprep.subr.bf16.mxu0 0
        %1370 = vmatpush1.bf16.msra.mxu0 0
        %1371 = vmatprep.subr.bf16.mxu0 0
        %1372 = vmatpush1.bf16.msra.mxu0 0
        %1373 = vmatprep.subr.bf16.mxu0 0
        %1374 = vmatpush1.bf16.msra.mxu0 0
        %1375 = vmatprep.subr.bf16.mxu0 0
        %1376 = vmatpush1.bf16.msra.mxu0 0
        %1377 = vmatprep.subr.bf16.mxu0 0
        %1378 = vmatpush1.bf16.msra.mxu0 0
        %1379 = vmatprep.subr.bf16.mxu0 0
        %1380 = vmatpush1.bf16.msra.mxu0 0
        %1381 = vmatprep.subr.bf16.mxu0 0
        %1382 = vmatpush1.bf16.msra.mxu0 0
        %1383 = vmatprep.subr.bf16.mxu0 0
        %1384 = vmatpush1.bf16.msra.mxu0 0
        %1385 = vmatprep.subr.bf16.mxu0 0
        %1386 = vmatpush1.bf16.msra.mxu0 0
        %1387 = vmatprep.subr.bf16.mxu0 0
        %1388 = vmatpush1.bf16.msra.mxu0 0
        %1389 = vmatprep.subr.bf16.mxu0 0
        %1390 = vmatpush1.bf16.msra.mxu0 0
        %1391 = vmatprep.subr.bf16.mxu0 0
        %1392 = vmatpush1.bf16.msra.mxu0 0
        %1393 = vmatprep.subr.bf16.mxu0 0
        %1394 = vmatpush1.bf16.msra.mxu0 0
        %1395 = vmatprep.subr.bf16.mxu0 0
        %1396 = vmatpush1.bf16.msra.mxu0 0
        %1397 = vmatprep.mubr.bf16.mxu0 0
        %1398 = vmatmul.mubr.bf16.gmra.mrb[0].mxu0 %v1359
        %v1399 = vpop.f32.mrb[0].mxu0
        %v1400 = vadd.f32 0.0, %v1399
        %v1401 = vpop.f32.mrb[0].mxu0
        %v1402 = vpop.f32.mrb[0].mxu0
        %v1403 = vpop.f32.mrb[0].mxu0
        %1404 = vdwg.mxu0
        %v1406 = vsel %vm1330, %v1354, 0
        %v1409 = vsel %vm1361, %v1236, 0
        %1411 = vmatprep.subr.bf16.mxu0 0
        %1412 = vmatpush1.bf16.msra.mxu0 %v1409
        %1413 = vmatprep.subr.bf16.mxu0 0
        %1414 = vmatpush1.bf16.msra.mxu0 0
        %1415 = vmatprep.subr.bf16.mxu0 0
        %1416 = vmatpush1.bf16.msra.mxu0 0
        %1417 = vmatprep.subr.bf16.mxu0 0
        %1418 = vmatpush1.bf16.msra.mxu0 0
        %1419 = vmatprep.subr.bf16.mxu0 0
        %1420 = vmatpush1.bf16.msra.mxu0 0
        %1421 = vmatprep.subr.bf16.mxu0 0
        %1422 = vmatpush1.bf16.msra.mxu0 0
        %1423 = vmatprep.subr.bf16.mxu0 0
        %1424 = vmatpush1.bf16.msra.mxu0 0
        %1425 = vmatprep.subr.bf16.mxu0 0
        %1426 = vmatpush1.bf16.msra.mxu0 0
        %1427 = vmatprep.subr.bf16.mxu0 0
        %1428 = vmatpush1.bf16.msra.mxu0 0
        %1429 = vmatprep.subr.bf16.mxu0 0
        %1430 = vmatpush1.bf16.msra.mxu0 0
        %1431 = vmatprep.subr.bf16.mxu0 0
        %1432 = vmatpush1.bf16.msra.mxu0 0
        %1433 = vmatprep.subr.bf16.mxu0 0
        %1434 = vmatpush1.bf16.msra.mxu0 0
        %1435 = vmatprep.subr.bf16.mxu0 0
        %1436 = vmatpush1.bf16.msra.mxu0 0
        %1437 = vmatprep.subr.bf16.mxu0 0
        %1438 = vmatpush1.bf16.msra.mxu0 0
        %1439 = vmatprep.subr.bf16.mxu0 0
        %1440 = vmatpush1.bf16.msra.mxu0 0
        %1441 = vmatprep.subr.bf16.mxu0 0
        %1442 = vmatpush1.bf16.msra.mxu0 0
        %1443 = vmatprep.mubr.bf16.mxu0 0
        %1444 = vmatmul.mubr.bf16.gmra.mrb[0].mxu0 %v1406
        %v1445 = vpop.f32.mrb[0].mxu0
        %v1446 = vadd.f32 0.0, %v1445
        %v1447 = vpop.f32.mrb[0].mxu0
        %v1448 = vpop.f32.mrb[0].mxu0
        %v1449 = vpop.f32.mrb[0].mxu0
        %1450 = vdwg.mxu0
        %v1451 = vpack.c.bf16 %v1400, %v1400
        %v1452 = vpack.c.bf16 %v1446, %v1446
        %v1453 = vld [vmem:[%s337] sm:$0xff]
        %v1454 = vld [vmem:[%s337 + $0x8] sm:$0xff]
        %v1455 = vld [vmem:[%s337 + $0x10] sm:$0xff]
        %v1456 = vld [vmem:[%s337 + $0x18] sm:$0xff]
        %v1457 = vld [vmem:[%s337 + $0x20] sm:$0xff]
        %v1458 = vld [vmem:[%s337 + $0x28] sm:$0xff]
        %v1459 = vld [vmem:[%s337 + $0x30] sm:$0xff]
        %v1460 = vld [vmem:[%s337 + $0x38] sm:$0xff]
        %v1461 = vld [vmem:[%s337 + $0x40] sm:$0xff]
        %v1462 = vld [vmem:[%s337 + $0x48] sm:$0xff]
        %v1463 = vld [vmem:[%s337 + $0x50] sm:$0xff]
        %v1464 = vld [vmem:[%s337 + $0x58] sm:$0xff]
        %v1465 = vld [vmem:[%s337 + $0x60] sm:$0xff]
        %v1466 = vld [vmem:[%s337 + $0x68] sm:$0xff]
        %v1467 = vld [vmem:[%s337 + $0x70] sm:$0xff]
        %v1468 = vld [vmem:[%s337 + $0x78] sm:$0xff]
        %v1477 = vunpack.c.l.b16 %v1453
        %v1478 = vunpack.c.h.b16 %v1453
        %v1479 = vunpack.c.l.b16 %v1454
        %v1480 = vunpack.c.h.b16 %v1454
        %v1481 = vunpack.c.l.b16 %v1455
        %v1482 = vunpack.c.h.b16 %v1455
        %v1483 = vunpack.c.l.b16 %v1456
        %v1484 = vunpack.c.h.b16 %v1456
        %v1485 = vunpack.c.l.b16 %v1457
        %v1486 = vunpack.c.h.b16 %v1457
        %v1487 = vunpack.c.l.b16 %v1458
        %v1488 = vunpack.c.h.b16 %v1458
        %v1489 = vunpack.c.l.b16 %v1459
        %v1490 = vunpack.c.h.b16 %v1459
        %v1491 = vunpack.c.l.b16 %v1460
        %v1492 = vunpack.c.h.b16 %v1460
        %v1493 = vpack.c.b16 %v1479, %v1477
        %v1494 = vpack.c.b16 %v1480, %v1478
        %v1495 = vpack.c.b16 %v1483, %v1481
        %v1496 = vpack.c.b16 %v1484, %v1482
        %v1497 = vpack.c.b16 %v1487, %v1485
        %v1498 = vpack.c.b16 %v1488, %v1486
        %v1499 = vpack.c.b16 %v1491, %v1489
        %v1500 = vpack.c.b16 %v1492, %v1490
        %v1510 = vsel %vm1237, %v1451, 0
        %1512 = vmatprep.subr.bf16.mxu0 %v1494
        %1513 = vmatpush1.bf16.msra.mxu0 %v1493
        %1514 = vmatprep.subr.bf16.mxu0 %v1496
        %1515 = vmatpush1.bf16.msra.mxu0 %v1495
        %1516 = vmatprep.subr.bf16.mxu0 %v1498
        %1517 = vmatpush1.bf16.msra.mxu0 %v1497
        %1518 = vmatprep.subr.bf16.mxu0 %v1500
        %1519 = vmatpush1.bf16.msra.mxu0 %v1499
        %1520 = vmatprep.subr.bf16.mxu0 0
        %1521 = vmatpush1.bf16.msra.mxu0 0
        %1522 = vmatprep.subr.bf16.mxu0 0
        %1523 = vmatpush1.bf16.msra.mxu0 0
        %1524 = vmatprep.subr.bf16.mxu0 0
        %1525 = vmatpush1.bf16.msra.mxu0 0
        %1526 = vmatprep.subr.bf16.mxu0 0
        %1527 = vmatpush1.bf16.msra.mxu0 0
        %1528 = vmatprep.subr.bf16.mxu0 0
        %1529 = vmatpush1.bf16.msra.mxu0 0
        %1530 = vmatprep.subr.bf16.mxu0 0
        %1531 = vmatpush1.bf16.msra.mxu0 0
        %1532 = vmatprep.subr.bf16.mxu0 0
        %1533 = vmatpush1.bf16.msra.mxu0 0
        %1534 = vmatprep.subr.bf16.mxu0 0
        %1535 = vmatpush1.bf16.msra.mxu0 0
        %1536 = vmatprep.subr.bf16.mxu0 0
        %1537 = vmatpush1.bf16.msra.mxu0 0
        %1538 = vmatprep.subr.bf16.mxu0 0
        %1539 = vmatpush1.bf16.msra.mxu0 0
        %1540 = vmatprep.subr.bf16.mxu0 0
        %1541 = vmatpush1.bf16.msra.mxu0 0
        %1542 = vmatprep.subr.bf16.mxu0 0
        %1543 = vmatpush1.bf16.msra.mxu0 0
        %1544 = vmatprep.mubr.bf16.mxu0 0
        %1545 = vmatmul.mubr.bf16.gmra.mrb[0].mxu0 %v1510
        %v1546 = vpop.f32.mrb[0].mxu0
        %v1547 = vadd.f32 0.0, %v1546
        %v1548 = vpop.f32.mrb[0].mxu0
        %v1549 = vadd.f32 0.0, %v1548
        %v1550 = vpop.f32.mrb[0].mxu0
        %v1551 = vpop.f32.mrb[0].mxu0
        %1552 = vdwg.mxu0
        %v1561 = vunpack.c.l.b16 %v1461
        %v1562 = vunpack.c.h.b16 %v1461
        %v1563 = vunpack.c.l.b16 %v1462
        %v1564 = vunpack.c.h.b16 %v1462
        %v1565 = vunpack.c.l.b16 %v1463
        %v1566 = vunpack.c.h.b16 %v1463
        %v1567 = vunpack.c.l.b16 %v1464
        %v1568 = vunpack.c.h.b16 %v1464
        %v1569 = vunpack.c.l.b16 %v1465
        %v1570 = vunpack.c.h.b16 %v1465
        %v1571 = vunpack.c.l.b16 %v1466
        %v1572 = vunpack.c.h.b16 %v1466
        %v1573 = vunpack.c.l.b16 %v1467
        %v1574 = vunpack.c.h.b16 %v1467
        %v1575 = vunpack.c.l.b16 %v1468
        %v1576 = vunpack.c.h.b16 %v1468
        %v1577 = vpack.c.b16 %v1563, %v1561
        %v1578 = vpack.c.b16 %v1564, %v1562
        %v1579 = vpack.c.b16 %v1567, %v1565
        %v1580 = vpack.c.b16 %v1568, %v1566
        %v1581 = vpack.c.b16 %v1571, %v1569
        %v1582 = vpack.c.b16 %v1572, %v1570
        %v1583 = vpack.c.b16 %v1575, %v1573
        %v1584 = vpack.c.b16 %v1576, %v1574
        %v1594 = vsel %vm1237, %v1452, 0
        %1596 = vmatprep.subr.bf16.mxu0 %v1578
        %1597 = vmatpush1.bf16.msra.mxu0 %v1577
        %1598 = vmatprep.subr.bf16.mxu0 %v1580
        %1599 = vmatpush1.bf16.msra.mxu0 %v1579
        %1600 = vmatprep.subr.bf16.mxu0 %v1582
        %1601 = vmatpush1.bf16.msra.mxu0 %v1581
        %1602 = vmatprep.subr.bf16.mxu0 %v1584
        %1603 = vmatpush1.bf16.msra.mxu0 %v1583
        %1604 = vmatprep.subr.bf16.mxu0 0
        %1605 = vmatpush1.bf16.msra.mxu0 0
        %1606 = vmatprep.subr.bf16.mxu0 0
        %1607 = vmatpush1.bf16.msra.mxu0 0
        %1608 = vmatprep.subr.bf16.mxu0 0
        %1609 = vmatpush1.bf16.msra.mxu0 0
        %1610 = vmatprep.subr.bf16.mxu0 0
        %1611 = vmatpush1.bf16.msra.mxu0 0
        %1612 = vmatprep.subr.bf16.mxu0 0
        %1613 = vmatpush1.bf16.msra.mxu0 0
        %1614 = vmatprep.subr.bf16.mxu0 0
        %1615 = vmatpush1.bf16.msra.mxu0 0
        %1616 = vmatprep.subr.bf16.mxu0 0
        %1617 = vmatpush1.bf16.msra.mxu0 0
        %1618 = vmatprep.subr.bf16.mxu0 0
        %1619 = vmatpush1.bf16.msra.mxu0 0
        %1620 = vmatprep.subr.bf16.mxu0 0
        %1621 = vmatpush1.bf16.msra.mxu0 0
        %1622 = vmatprep.subr.bf16.mxu0 0
        %1623 = vmatpush1.bf16.msra.mxu0 0
        %1624 = vmatprep.subr.bf16.mxu0 0
        %1625 = vmatpush1.bf16.msra.mxu0 0
        %1626 = vmatprep.subr.bf16.mxu0 0
        %1627 = vmatpush1.bf16.msra.mxu0 0
        %1628 = vmatprep.mubr.bf16.mxu0 0
        %1629 = vmatmul.mubr.bf16.gmra.mrb[0].mxu0 %v1594
        %v1630 = vpop.f32.mrb[0].mxu0
        %v1631 = vadd.f32 0.0, %v1630
        %v1632 = vpop.f32.mrb[0].mxu0
        %v1633 = vadd.f32 0.0, %v1632
        %v1634 = vpop.f32.mrb[0].mxu0
        %v1635 = vpop.f32.mrb[0].mxu0
        %1636 = vdwg.mxu0
        %v1637 = vadd.f32 %v1547, %v1631
        %v1638 = vadd.f32 %v1549, %v1633
        %p1639 = scmp.eq.s32.totalorder %s35, 0
        // Predicated region
        $region53: #{tpu_custom_call.1} parent=39 // pred_check
          %p1640 = pneg %p1639
        $region54: #{tpu_custom_call.1} parent=39 // pred_check_branch
          %1642 = sbr.rel (%p1640) target = $region56
        $region55: #{tpu_custom_call.1} parent=39 // pred_region
          %1643 = vst [vmem:[#allocation2] sm:$0xff] %v1637
          %1644 = vst [vmem:[#allocation2 + $0x8] sm:$0xff] %v1638
        $region56: #{tpu_custom_call.1} parent=39 // pred_fallthru
          _
        %p1645 = scmp.gt.s32.totalorder %s35, 0
        // Predicated region
        $region57: #{tpu_custom_call.1} parent=39 // pred_check
          %p1646 = pneg %p1645
        $region58: #{tpu_custom_call.1} parent=39 // pred_check_branch
          %1648 = sbr.rel (%p1646) target = $region60
        $region59: #{tpu_custom_call.1} parent=39 // pred_region
          %v1649 = vld [vmem:[#allocation2] sm:$0xff]
          %v1650 = vld [vmem:[#allocation2 + $0x8] sm:$0xff]
          %v1651 = vadd.f32 %v1649, %v1637
          %v1652 = vadd.f32 %v1650, %v1638
          %1653 = vst [vmem:[#allocation2] sm:$0xff] %v1651
          %1654 = vst [vmem:[#allocation2 + $0x8] sm:$0xff] %v1652
        $region60: #{tpu_custom_call.1} parent=39 // pred_fallthru
          _
        %p1655 = scmp.eq.s32.totalorder %s35, 1
        // Predicated region
        $region61: #{tpu_custom_call.1} parent=39 // pred_check
          %p1656 = pneg %p1655
        $region62: #{tpu_custom_call.1} parent=39 // pred_check_branch
          %1658 = sbr.rel (%p1656) target = $region64
        $region63: #{tpu_custom_call.1} parent=39 // pred_region
          %v1659 = vld [vmem:[#allocation2] sm:$0xff]
          %v1660 = vld [vmem:[#allocation2 + $0x8] sm:$0xff]
          %v1661 = vld [vmem:[%s4] sm:$0x3]
          %v1663 = vlaneseq
          %v1664 = vshrl.u32 %v1663, 7
          %v1665 = vsub.s32 0, %v1664
          %v1666 = vrot.slane %v1661, %v1665
          %v1667 = vlaneseq
          %v1668 = vshrl.u32 %v1667, 7
          %v1669 = vsub.s32 1, %v1668
          %v1670 = vrot.slane %v1661, %v1669
          %v1673 = vadd.f32 %v1659, %v1666
          %v1674 = vadd.f32 %v1660, %v1670
          %1675 = vst [vmem:[%s377] sm:$0xff] %v1673
          %1676 = vst [vmem:[%s377 + $0x8] sm:$0xff] %v1674
        $region64: #{tpu_custom_call.1} parent=39 // pred_fallthru
          _
        %s1677 = sand.u32 %s175, 1
        %s1678 = scalar_lea.sflag [#allocation5], %s1677
        %s1679 = sand.u32 %s175, 1
        %s1680 = smul.addr %s1679, 16
        %s1681 = scalar_lea.vmem [#allocation9], %s1680
        %s1682 = sand.u32 %s203, 1
        %s1683 = scalar_lea.sflag [#allocation11], %s1682
        %s1684 = sand.u32 %s203, 1
        %s1685 = smul.addr %s1684, 8
        %s1686 = scalar_lea.vmem [#allocation10], %s1685
        // Predicated region
        $region65: #{tpu_custom_call.1} parent=39 // pred_check
          %p1687 = pneg %p185
        $region66: #{tpu_custom_call.1} parent=39 // pred_check_branch
          %1689 = sbr.rel (%p1687) target = $region68
        $region67: #{tpu_custom_call.1} parent=39 // pred_region
          %s1691 = ssub.s32 256, 256
          %1692 = vsyncadd %s1678, %s1691
          %s1693 = smul.addr %s34, 2
          %s1694 = smul.addr %s1693, 128
          %s1695 = scalar_lea.hbm %s5, %s1694
          %s1697 = sshll.u32 %s1681, 4
          %s1698 = int_to_ptr.vmem [resolvable:$true] %s1697
          %1700 = dma.vmem_to_hbm [thread:$0]  %s1698, 256, %s1695, %s1678
        $region68: #{tpu_custom_call.1} parent=39 // pred_fallthru
          _
        // Predicated region
        $region69: #{tpu_custom_call.1} parent=39 // pred_check
          %p1701 = pneg %p213
        $region70: #{tpu_custom_call.1} parent=39 // pred_check_branch
          %1703 = sbr.rel (%p1701) target = $region72
        $region71: #{tpu_custom_call.1} parent=39 // pred_region
          %s1704 = smul.u32 2, %s35
          %s1706 = ssub.s32 128, 128
          %1707 = vsyncadd %s1683, %s1706
          %s1708 = smul.addr %s34, 4
          %s1709 = sadd.s32 %s1704, %s1708
          %s1710 = smul.addr %s1709, 64
          %s1711 = scalar_lea.hbm %s6, %s1710
          %s1712 = sshll.u32 %s1686, 4
          %s1713 = int_to_ptr.vmem [resolvable:$true] %s1712
          %1718 = dma.vmem_to_hbm [thread:$0]  %s1713, 128, %s1711, %s1683, 64, 64, 4
        $region72: #{tpu_custom_call.1} parent=39 // pred_fallthru
          _
      $region40: #{tpu_custom_call.1} parent=5 // pred_fallthru
        _
      %p1719 = scmp.le.s32.totalorder 2, %s25
      // Predicated region
      $region73: #{tpu_custom_call.1} parent=5 // pred_check
        %p1720 = pneg %p1719
      $region74: #{tpu_custom_call.1} parent=5 // pred_check_branch
        %1722 = sbr.rel (%p1720) target = $region76
      $region75: #{tpu_custom_call.1} parent=5 // pred_region
        %s1723 = ssub.s32 %s25, 2
        // Predicated region
        $region77: #{tpu_custom_call.1} parent=75 // pred_check
          %p1724 = pneg %p191
        $region78: #{tpu_custom_call.1} parent=75 // pred_check_branch
          %1726 = sbr.rel (%p1724) target = $region80
        $region79: #{tpu_custom_call.1} parent=75 // pred_region
          %s1727 = sand.u32 %s176, 1
          %s1728 = scalar_lea.sflag [#allocation5], %s1727
          %s1729 = sand.u32 %s176, 1
          %s1730 = smul.addr %s1729, 16
          %s1731 = scalar_lea.vmem [#allocation9], %s1730
          %1732 = dma.done %s1728, 256
        $region80: #{tpu_custom_call.1} parent=75 // pred_fallthru
          _
        // Predicated region
        $region81: #{tpu_custom_call.1} parent=75 // pred_check
          %p1733 = pneg %p219
        $region82: #{tpu_custom_call.1} parent=75 // pred_check_branch
          %1735 = sbr.rel (%p1733) target = $region84
        $region83: #{tpu_custom_call.1} parent=75 // pred_region
          %s1736 = sand.u32 %s204, 1
          %s1737 = scalar_lea.sflag [#allocation11], %s1736
          %s1738 = sand.u32 %s204, 1
          %s1739 = smul.addr %s1738, 8
          %s1740 = scalar_lea.vmem [#allocation10], %s1739
          %1741 = dma.done %s1737, 128
        $region84: #{tpu_custom_call.1} parent=75 // pred_fallthru
          _
      $region76: #{tpu_custom_call.1} parent=5 // pred_fallthru
        _
    $region6: #{tpu_custom_call.1} parent=1 // loop_footer
      %s29 = sadd.s32 1, %s25
    $region7: #{tpu_custom_call.1} parent=1 // loop_footer_branch
      %24 = sbr.rel target = $region3
    $region8: #{tpu_custom_call.1} parent=1 // loop_exit
      _
    %1742 = vsyncpa [#allocation4], 1
    %s1743 = scalar_lea.sflag [#allocation4], 1
    %1744 = vsyncpa %s1743, 1
    %1745 = vsyncpa [#allocation7], 1
    %s1746 = scalar_lea.sflag [#allocation7], 1
    %1747 = vsyncpa %s1746, 1
    %1748 = vsyncpa [#allocation5], 1
    %s1749 = scalar_lea.sflag [#allocation5], 1
    %1750 = vsyncpa %s1749, 1
    %1751 = vsyncpa [#allocation11], 1
    %s1752 = scalar_lea.sflag [#allocation11], 1
    %1753 = vsyncpa %s1752, 1

</llo_original>
